<compile_context>
chip_gen: v7x
topology: tpu7x:2x2x1
jax: 0.10.0
libtpu: 0.0.40
codegen_flags: <defaults>
</compile_context>

<pallas_src>
import functools

import jax
import jax.numpy as jnp
from jax import lax
from jax.experimental import pallas as pl
from jax.experimental.pallas import tpu as pltpu
import numpy as np


def _round_up(x, m):
    return ((x + m - 1) // m) * m


def _softplus(x):
    # Numerically stable softplus using only exp/log (Mosaic-friendly).
    return jnp.maximum(x, 0.0) + jnp.log(1.0 + jnp.exp(-jnp.abs(x)))


def _encoder_kernel(data_ref, wih_ref, whh_ref, b_ref,
                    w1_ref, b1_ref, w2_ref, b2_ref,
                    out_ref, xproj_ref, mbc_ref,
                    *, seq_len, batch_pad, z_dim, data_dim):
    """Full ODE-RNN encoder forward in one kernel invocation.

    data_ref : (T*Bp, 2*D)   time-major, time-REVERSED, batch-padded concat(truth, mask)
    wih_ref  : (2*D, 4*Lp)   LSTMCell W_ih^T, per-gate zero-padded to Lp lanes
    whh_ref  : (Lp, 4*Lp)    LSTMCell W_hh^T, per-gate zero-padded
    b_ref    : (1, 4*Lp)     b_ih + b_hh, per-gate zero-padded
    w1_ref   : (Lp, Hp), b1_ref: (1, Hp)
    w2_ref   : (Hp, Pout), b2_ref: (1, Pout)
    out_ref  : (Bp, Pout)    packed head output: [:, :Z]=mean, [:, Z:2Z]=softplus(std)
    xproj_ref: (T*Bp, 4*Lp)  VMEM scratch — hoisted input projection
    mbc_ref  : (T*Bp, Lp)    VMEM scratch — hoisted, lane-broadcast observation mask
    """
    Lp = whh_ref.shape[0]

    data = data_ref[...]                                        # (T*Bp, 2D)

    # ---- hoisted off the serial recurrence --------------------------------
    # Input projection for every timestep in one MXU matmul, bias folded in.
    xproj_ref[...] = (
        jnp.dot(data, wih_ref[...], preferred_element_type=jnp.float32)
        + b_ref[...])

    # get_mask(xi) for every timestep: (sum of mask half > 0), pre-broadcast.
    msum = jnp.sum(data[:, data_dim:], axis=-1, keepdims=True)  # (T*Bp, 1)
    mbc_ref[...] = jnp.broadcast_to(
        (msum > 0.0).astype(jnp.float32), (seq_len * batch_pad, Lp))

    whh = whh_ref[...]

    # ---- serial masked-LSTM recurrence (only h @ W_hh on the chain) --------
    def step(k, carry):
        x, c = carry
        row = pl.multiple_of(k * batch_pad, batch_pad)
        gproj = xproj_ref[pl.ds(row, batch_pad), :]             # (Bp, 4*Lp)
        gates = gproj + jnp.dot(x, whh, preferred_element_type=jnp.float32)

        # nn.LSTMCell gate order: input, forget, cell, output (lane-aligned slices)
        i_g = jax.nn.sigmoid(gates[:, 0 * Lp:1 * Lp])
        f_g = jax.nn.sigmoid(gates[:, 1 * Lp:2 * Lp])
        g_g = jnp.tanh(gates[:, 2 * Lp:3 * Lp])
        o_g = jax.nn.sigmoid(gates[:, 3 * Lp:4 * Lp])
        c_new = f_g * c + i_g * g_g
        h_new = o_g * jnp.tanh(c_new)

        m = mbc_ref[pl.ds(row, batch_pad), :]                   # (Bp, Lp)
        x_out = m * h_new + (1.0 - m) * x
        c_out = m * c_new + (1.0 - m) * c
        return x_out, c_out

    x0 = jnp.zeros((batch_pad, Lp), jnp.float32)
    c0 = jnp.zeros((batch_pad, Lp), jnp.float32)
    x, _ = lax.fori_loop(0, seq_len, step, (x0, c0), unroll=True)

    # ---- transform_z0: Linear -> Tanh -> Linear, packed lane-dense output ---
    hid = jnp.tanh(jnp.dot(x, w1_ref[...], preferred_element_type=jnp.float32)
                   + b1_ref[...])
    out = (jnp.dot(hid, w2_ref[...], preferred_element_type=jnp.float32)
           + b2_ref[...])                                       # (Bp, Pout)
    col = lax.broadcasted_iota(jnp.int32, out.shape, 1)
    out_ref[...] = jnp.where(col >= z_dim, _softplus(out), out)


def _pad_gate_rows(w, L, Lp):
    """(4L, In) -> (4Lp, In) with each gate block zero-padded from L to Lp rows."""
    chunks = [jnp.pad(w[g * L:(g + 1) * L], ((0, Lp - L), (0, 0))) for g in range(4)]
    return jnp.concatenate(chunks, axis=0)


def _pad_gate_vec(v, L, Lp):
    """(4L,) -> (4Lp,) with each gate block zero-padded from L to Lp."""
    chunks = [jnp.pad(v[g * L:(g + 1) * L], (0, Lp - L)) for g in range(4)]
    return jnp.concatenate(chunks, axis=0)


def encoder_z0_ode_rnn_forward(truth, mask, time_steps, params):
    """Mirrors Encoder_z0_ODE_RNN.forward (adj=None, enc_type != 'rnn2').

    truth      : (B, T, D) float32
    mask       : (B, T, D) float32
    time_steps : (B, T)    float32 (only consumed by the identity solver -> unused)
    Returns (mean_z0, std_z0), each of shape (1, B, z0_dim).
    """
    del time_steps  # consumed only by the (identity) z0_diffeq_solver
    B, T, D = truth.shape
    L = params["w_hh"].shape[1]          # W_hh: (4L, L)
    Z = params["b2"].shape[0] // 2
    H = params["b1"].shape[0]

    LANE, SUB = 128, 8
    Lp = _round_up(L, LANE)
    Hp = _round_up(H, LANE)
    Pout = _round_up(2 * Z, LANE)
    Bp = _round_up(B, SUB)

    # Data: concat -> time-major -> pre-reversed (run_backwards) -> batch-padded -> 2D.
    data = jnp.concatenate([truth, mask], axis=-1).astype(jnp.float32)   # (B,T,2D)
    data = jnp.transpose(data, (1, 0, 2))                                # (T,B,2D)
    data = jnp.flip(data, axis=0)                                        # reversed time
    data = jnp.pad(data, ((0, 0), (0, Bp - B), (0, 0)))                  # (T,Bp,2D)
    data2d = data.reshape(T * Bp, 2 * D)

    # LSTM weights: per-gate pad L -> Lp, transposed for x @ W layout.
    wih_p = _pad_gate_rows(params["w_ih"].astype(jnp.float32), L, Lp).T          # (2D, 4Lp)
    whh_p = jnp.pad(_pad_gate_rows(params["w_hh"].astype(jnp.float32), L, Lp),
                    ((0, 0), (0, Lp - L))).T                                     # (Lp, 4Lp)
    b_p = _pad_gate_vec((params["b_ih"] + params["b_hh"]).astype(jnp.float32),
                        L, Lp).reshape(1, 4 * Lp)                                # (1, 4Lp)

    # transform_z0 weights, transposed + zero-padded to lane multiples.
    w1_p = jnp.pad(params["w1"].T.astype(jnp.float32), ((0, Lp - L), (0, Hp - H)))
    b1_p = jnp.pad(params["b1"].astype(jnp.float32), (0, Hp - H)).reshape(1, Hp)
    w2_p = jnp.pad(params["w2"].T.astype(jnp.float32), ((0, Hp - H), (0, Pout - 2 * Z)))
    b2_p = jnp.pad(params["b2"].astype(jnp.float32), (0, Pout - 2 * Z)).reshape(1, Pout)

    kernel = functools.partial(_encoder_kernel, seq_len=T, batch_pad=Bp,
                               z_dim=Z, data_dim=D)
    vmem = pl.BlockSpec(memory_space=pltpu.MemorySpace.VMEM)
    out = pl.pallas_call(
        kernel,
        out_shape=jax.ShapeDtypeStruct((Bp, Pout), jnp.float32),
        in_specs=[vmem] * 8,
        out_specs=vmem,
        scratch_shapes=[
            pltpu.VMEM((T * Bp, 4 * Lp), jnp.float32),   # hoisted input projection
            pltpu.VMEM((T * Bp, Lp), jnp.float32),       # hoisted broadcast mask
        ],
    )(data2d, wih_p, whh_p, b_p, w1_p, b1_p, w2_p, b2_p)

    mean = out[:B, :Z].reshape(1, B, Z)
    std = out[:B, Z:2 * Z].reshape(1, B, Z)
    return mean, std


def _reference_forward(truth, mask, time_steps, params):
    """Pure-JAX reference of the same forward pass (for verification)."""
    del time_steps
    B, T, D = truth.shape
    L = params["w_hh"].shape[1]
    Z = params["b2"].shape[0] // 2
    data = jnp.concatenate([truth, mask], axis=-1)

    x = jnp.zeros((B, L), jnp.float32)
    c = jnp.zeros((B, L), jnp.float32)
    for i in reversed(range(T)):
        xi = data[:, i, :]
        gates = (xi @ params["w_ih"].T + params["b_ih"]
                 + x @ params["w_hh"].T + params["b_hh"])
        i_g = jax.nn.sigmoid(gates[:, 0 * L:1 * L])
        f_g = jax.nn.sigmoid(gates[:, 1 * L:2 * L])
        g_g = jnp.tanh(gates[:, 2 * L:3 * L])
        o_g = jax.nn.sigmoid(gates[:, 3 * L:4 * L])
        c_new = f_g * c + i_g * g_g
        h_new = o_g * jnp.tanh(c_new)
        m = (jnp.sum(xi[:, D:], axis=-1, keepdims=True) > 0).astype(jnp.float32)
        x = m * h_new + (1.0 - m) * x
        c = m * c_new + (1.0 - m) * c

    hid = jnp.tanh(x @ params["w1"].T + params["b1"])
    out = hid @ params["w2"].T + params["b2"]
    return (out[:, :Z].reshape(1, B, Z),
            jax.nn.softplus(out[:, Z:]).reshape(1, B, Z))


def _init_params(key, latent_dim, input_dim, z0_dim, n_units=100):
    """Deterministic parameter init matching the module's declared shapes."""
    ks = jax.random.split(key, 8)
    s = 1.0 / np.sqrt(latent_dim)
    return {
        # nn.LSTMCell(input_dim, latent_dim)
        "w_ih": jax.random.uniform(ks[0], (4 * latent_dim, input_dim), jnp.float32, -s, s),
        "w_hh": jax.random.uniform(ks[1], (4 * latent_dim, latent_dim), jnp.float32, -s, s),
        "b_ih": jax.random.uniform(ks[2], (4 * latent_dim,), jnp.float32, -s, s),
        "b_hh": jax.random.uniform(ks[3], (4 * latent_dim,), jnp.float32, -s, s),
        # transform_z0: Linear(latent_dim, 100), Linear(100, 2*z0_dim)
        # (utils.init_network_weights: normal(std=0.1), zero bias)
        "w1": 0.1 * jax.random.normal(ks[4], (n_units, latent_dim), jnp.float32),
        "b1": jnp.zeros((n_units,), jnp.float32),
        "w2": 0.1 * jax.random.normal(ks[5], (2 * z0_dim, n_units), jnp.float32),
        "b2": jnp.zeros((2 * z0_dim,), jnp.float32),
    }


if __name__ == "__main__":
    # Small shapes consistent with the module: batch=2, seq=8, data dims=8
    # -> input_dim = 2 * 8 = 16 (concat of truth and observation mask),
    #    latent_dim = z0_dim = 32, transform hidden = 100.
    B, T, D = 2, 8, 8
    latent_dim = 32
    z0_dim = latent_dim

    key = jax.random.PRNGKey(0)
    k_truth, k_mask, k_time, k_param = jax.random.split(key, 4)

    truth = jax.random.normal(k_truth, (B, T, D), jnp.float32)
    obs_mask = (jax.random.uniform(k_mask, (B, T, D)) > 0.3).astype(jnp.float32)
    time_steps = jnp.sort(jax.random.uniform(k_time, (B, T)), axis=1)

    params = _init_params(k_param, latent_dim, 2 * D, z0_dim)

    fwd = jax.jit(functools.partial(encoder_z0_ode_rnn_forward, params=params))
    mean_z0, std_z0 = fwd(truth, obs_mask, time_steps)
    jax.block_until_ready((mean_z0, std_z0))

    ref_mean, ref_std = _reference_forward(truth, obs_mask, time_steps, params)
    np.testing.assert_allclose(np.asarray(mean_z0), np.asarray(ref_mean), rtol=1e-2, atol=1e-2)
    np.testing.assert_allclose(np.asarray(std_z0), np.asarray(ref_std), rtol=1e-2, atol=1e-2)
    assert mean_z0.shape == (1, B, z0_dim) and std_z0.shape == (1, B, z0_dim)

    print("KERNEL_OK")
</pallas_src>

<mosaic_0001>
module attributes {stable_mosaic.version = 11 : i64} {
  func.func @_encoder_kernel(%arg0: memref<64x16xf32, #tpu.memory_space<vmem>>, %arg1: memref<16x512xf32, #tpu.memory_space<vmem>>, %arg2: memref<128x512xf32, #tpu.memory_space<vmem>>, %arg3: memref<1x512xf32, #tpu.memory_space<vmem>>, %arg4: memref<128x128xf32, #tpu.memory_space<vmem>>, %arg5: memref<1x128xf32, #tpu.memory_space<vmem>>, %arg6: memref<128x128xf32, #tpu.memory_space<vmem>>, %arg7: memref<1x128xf32, #tpu.memory_space<vmem>>, %arg8: memref<8x128xf32, #tpu.memory_space<vmem>>, %arg9: memref<64x512xf32, #tpu.memory_space<vmem>>, %arg10: memref<64x128xf32, #tpu.memory_space<vmem>>) attributes {dimension_semantics = [], scalar_prefetch = 0 : i64, scratch_operands = 2 : i64, tpu.core_type = #tpu.core_type<tc>} {
    %c0 = arith.constant 0 : index
    %c0_0 = arith.constant 0 : index
    %0 = vector.load %arg0[%c0, %c0_0] : memref<64x16xf32, #tpu.memory_space<vmem>>, vector<64x16xf32>
    %c0_1 = arith.constant 0 : index
    %c0_2 = arith.constant 0 : index
    %1 = vector.load %arg1[%c0_1, %c0_2] : memref<16x512xf32, #tpu.memory_space<vmem>>, vector<16x512xf32>
    %cst = arith.constant dense<0.000000e+00> : vector<64x512xf32>
    %2 = tpu.matmul %0, %1, %cst {dimension_numbers = #tpu.dot_dimension_numbers<[1], [0], [0], [1], [0, 0, 1, 1], [], []>} : vector<64x16xf32>, vector<16x512xf32>, vector<64x512xf32> -> vector<64x512xf32>
    %c0_3 = arith.constant 0 : index
    %c0_4 = arith.constant 0 : index
    %3 = vector.load %arg3[%c0_3, %c0_4] : memref<1x512xf32, #tpu.memory_space<vmem>>, vector<1x512xf32>
    %4 = vector.broadcast %3 : vector<1x512xf32> to vector<64x512xf32>
    %5 = arith.addf %2, %4 : vector<64x512xf32>
    %c0_5 = arith.constant 0 : index
    %c0_6 = arith.constant 0 : index
    %6 = vector.load %arg9[%c0_5, %c0_6] : memref<64x512xf32, #tpu.memory_space<vmem>>, vector<64x512xf32>
    tpu.vector_store %arg9[%c0_5, %c0_6], %5 {strides = array<i32>} : memref<64x512xf32, #tpu.memory_space<vmem>>, vector<64x512xf32>,
    %7 = vector.extract_strided_slice %0 {offsets = [0, 8], sizes = [64, 8], strides = [1, 1]} : vector<64x16xf32> to vector<64x8xf32>
    %cst_7 = arith.constant dense<0.000000e+00> : vector<64xf32>
    %8 = vector.multi_reduction <add>, %7, %cst_7 [1] : vector<64x8xf32> to vector<64xf32>
    %9 = vector.shape_cast %8 : vector<64xf32> to vector<64x1xf32>
    %cst_8 = arith.constant 0.000000e+00 : f32
    %10 = vector.broadcast %cst_8 : f32 to vector<64x1xf32>
    %11 = arith.cmpf ogt, %9, %10 : vector<64x1xf32>
    %12 = arith.extui %11 : vector<64x1xi1> to vector<64x1xi32>
    %13 = arith.sitofp %12 : vector<64x1xi32> to vector<64x1xf32>
    %14 = vector.shape_cast %13 : vector<64x1xf32> to vector<64x1xf32>
    %15 = vector.broadcast %14 : vector<64x1xf32> to vector<64x128xf32>
    %c0_9 = arith.constant 0 : index
    %c0_10 = arith.constant 0 : index
    %16 = vector.load %arg10[%c0_9, %c0_10] : memref<64x128xf32, #tpu.memory_space<vmem>>, vector<64x128xf32>
    tpu.vector_store %arg10[%c0_9, %c0_10], %15 {strides = array<i32>} : memref<64x128xf32, #tpu.memory_space<vmem>>, vector<64x128xf32>,
    %c0_11 = arith.constant 0 : index
    %c0_12 = arith.constant 0 : index
    %17 = vector.load %arg2[%c0_11, %c0_12] : memref<128x512xf32, #tpu.memory_space<vmem>>, vector<128x512xf32>
    %cst_13 = arith.constant 0.000000e+00 : f32
    %18 = vector.broadcast %cst_13 : f32 to vector<8x128xf32>
    %cst_14 = arith.constant 0.000000e+00 : f32
    %19 = vector.broadcast %cst_14 : f32 to vector<8x128xf32>
    %c0_i32 = arith.constant 0 : i32
    %c8_i32 = arith.constant 8 : i32
    %20 = arith.muli %c0_i32, %c8_i32 : i32
    %21 = tpu.assume_multiple %20, 8 : i32
    %22 = arith.index_cast %21 : i32 to index
    %c0_15 = arith.constant 0 : index
    %23 = vector.load %arg9[%22, %c0_15] : memref<64x512xf32, #tpu.memory_space<vmem>>, vector<8x512xf32>
    %cst_16 = arith.constant dense<0.000000e+00> : vector<8x512xf32>
    %24 = tpu.matmul %18, %17, %cst_16 {dimension_numbers = #tpu.dot_dimension_numbers<[1], [0], [0], [1], [0, 0, 1, 1], [], []>} : vector<8x128xf32>, vector<128x512xf32>, vector<8x512xf32> -> vector<8x512xf32>
    %25 = arith.addf %23, %24 : vector<8x512xf32>
    %26 = vector.extract_strided_slice %25 {offsets = [0, 0], sizes = [8, 128], strides = [1, 1]} : vector<8x512xf32> to vector<8x128xf32>
    %27 = arith.negf %26 : vector<8x128xf32>
    %28 = math.exp %27 : vector<8x128xf32>
    %cst_17 = arith.constant 1.000000e+00 : f32
    %29 = vector.broadcast %cst_17 : f32 to vector<8x128xf32>
    %30 = arith.addf %29, %28 : vector<8x128xf32>
    %31 = arith.divf %29, %30 : vector<8x128xf32>
    %32 = vector.extract_strided_slice %25 {offsets = [0, 128], sizes = [8, 128], strides = [1, 1]} : vector<8x512xf32> to vector<8x128xf32>
    %33 = arith.negf %32 : vector<8x128xf32>
    %34 = math.exp %33 : vector<8x128xf32>
    %cst_18 = arith.constant 1.000000e+00 : f32
    %35 = vector.broadcast %cst_18 : f32 to vector<8x128xf32>
    %36 = arith.addf %35, %34 : vector<8x128xf32>
    %37 = arith.divf %35, %36 : vector<8x128xf32>
    %38 = vector.extract_strided_slice %25 {offsets = [0, 256], sizes = [8, 128], strides = [1, 1]} : vector<8x512xf32> to vector<8x128xf32>
    %39 = math.tanh %38 : vector<8x128xf32>
    %40 = vector.extract_strided_slice %25 {offsets = [0, 384], sizes = [8, 128], strides = [1, 1]} : vector<8x512xf32> to vector<8x128xf32>
    %41 = arith.negf %40 : vector<8x128xf32>
    %42 = math.exp %41 : vector<8x128xf32>
    %cst_19 = arith.constant 1.000000e+00 : f32
    %43 = vector.broadcast %cst_19 : f32 to vector<8x128xf32>
    %44 = arith.addf %43, %42 : vector<8x128xf32>
    %45 = arith.divf %43, %44 : vector<8x128xf32>
    %46 = arith.mulf %37, %19 : vector<8x128xf32>
    %47 = arith.mulf %31, %39 : vector<8x128xf32>
    %48 = arith.addf %46, %47 : vector<8x128xf32>
    %49 = math.tanh %48 : vector<8x128xf32>
    %50 = arith.mulf %45, %49 : vector<8x128xf32>
    %51 = arith.index_cast %21 : i32 to index
    %c0_20 = arith.constant 0 : index
    %52 = vector.load %arg10[%51, %c0_20] : memref<64x128xf32, #tpu.memory_space<vmem>>, vector<8x128xf32>
    %53 = arith.mulf %52, %50 : vector<8x128xf32>
    %cst_21 = arith.constant 1.000000e+00 : f32
    %54 = vector.broadcast %cst_21 : f32 to vector<8x128xf32>
    %55 = arith.subf %54, %52 : vector<8x128xf32>
    %56 = arith.mulf %55, %18 : vector<8x128xf32>
    %57 = arith.addf %53, %56 : vector<8x128xf32>
    %58 = arith.mulf %52, %48 : vector<8x128xf32>
    %cst_22 = arith.constant 1.000000e+00 : f32
    %59 = vector.broadcast %cst_22 : f32 to vector<8x128xf32>
    %60 = arith.subf %59, %52 : vector<8x128xf32>
    %61 = arith.mulf %60, %19 : vector<8x128xf32>
    %62 = arith.addf %58, %61 : vector<8x128xf32>
    %c1_i32 = arith.constant 1 : i32
    %c8_i32_23 = arith.constant 8 : i32
    %63 = arith.muli %c1_i32, %c8_i32_23 : i32
    %64 = tpu.assume_multiple %63, 8 : i32
    %65 = arith.index_cast %64 : i32 to index
    %c0_24 = arith.constant 0 : index
    %66 = vector.load %arg9[%65, %c0_24] : memref<64x512xf32, #tpu.memory_space<vmem>>, vector<8x512xf32>
    %cst_25 = arith.constant dense<0.000000e+00> : vector<8x512xf32>
    %67 = tpu.matmul %57, %17, %cst_25 {dimension_numbers = #tpu.dot_dimension_numbers<[1], [0], [0], [1], [0, 0, 1, 1], [], []>} : vector<8x128xf32>, vector<128x512xf32>, vector<8x512xf32> -> vector<8x512xf32>
    %68 = arith.addf %66, %67 : vector<8x512xf32>
    %69 = vector.extract_strided_slice %68 {offsets = [0, 0], sizes = [8, 128], strides = [1, 1]} : vector<8x512xf32> to vector<8x128xf32>
    %70 = arith.negf %69 : vector<8x128xf32>
    %71 = math.exp %70 : vector<8x128xf32>
    %cst_26 = arith.constant 1.000000e+00 : f32
    %72 = vector.broadcast %cst_26 : f32 to vector<8x128xf32>
    %73 = arith.addf %72, %71 : vector<8x128xf32>
    %74 = arith.divf %72, %73 : vector<8x128xf32>
    %75 = vector.extract_strided_slice %68 {offsets = [0, 128], sizes = [8, 128], strides = [1, 1]} : vector<8x512xf32> to vector<8x128xf32>
    %76 = arith.negf %75 : vector<8x128xf32>
    %77 = math.exp %76 : vector<8x128xf32>
    %cst_27 = arith.constant 1.000000e+00 : f32
    %78 = vector.broadcast %cst_27 : f32 to vector<8x128xf32>
    %79 = arith.addf %78, %77 : vector<8x128xf32>
    %80 = arith.divf %78, %79 : vector<8x128xf32>
    %81 = vector.extract_strided_slice %68 {offsets = [0, 256], sizes = [8, 128], strides = [1, 1]} : vector<8x512xf32> to vector<8x128xf32>
    %82 = math.tanh %81 : vector<8x128xf32>
    %83 = vector.extract_strided_slice %68 {offsets = [0, 384], sizes = [8, 128], strides = [1, 1]} : vector<8x512xf32> to vector<8x128xf32>
    %84 = arith.negf %83 : vector<8x128xf32>
    %85 = math.exp %84 : vector<8x128xf32>
    %cst_28 = arith.constant 1.000000e+00 : f32
    %86 = vector.broadcast %cst_28 : f32 to vector<8x128xf32>
    %87 = arith.addf %86, %85 : vector<8x128xf32>
    %88 = arith.divf %86, %87 : vector<8x128xf32>
    %89 = arith.mulf %80, %62 : vector<8x128xf32>
    %90 = arith.mulf %74, %82 : vector<8x128xf32>
    %91 = arith.addf %89, %90 : vector<8x128xf32>
    %92 = math.tanh %91 : vector<8x128xf32>
    %93 = arith.mulf %88, %92 : vector<8x128xf32>
    %94 = arith.index_cast %64 : i32 to index
    %c0_29 = arith.constant 0 : index
    %95 = vector.load %arg10[%94, %c0_29] : memref<64x128xf32, #tpu.memory_space<vmem>>, vector<8x128xf32>
    %96 = arith.mulf %95, %93 : vector<8x128xf32>
    %cst_30 = arith.constant 1.000000e+00 : f32
    %97 = vector.broadcast %cst_30 : f32 to vector<8x128xf32>
    %98 = arith.subf %97, %95 : vector<8x128xf32>
    %99 = arith.mulf %98, %57 : vector<8x128xf32>
    %100 = arith.addf %96, %99 : vector<8x128xf32>
    %101 = arith.mulf %95, %91 : vector<8x128xf32>
    %cst_31 = arith.constant 1.000000e+00 : f32
    %102 = vector.broadcast %cst_31 : f32 to vector<8x128xf32>
    %103 = arith.subf %102, %95 : vector<8x128xf32>
    %104 = arith.mulf %103, %62 : vector<8x128xf32>
    %105 = arith.addf %101, %104 : vector<8x128xf32>
    %c2_i32 = arith.constant 2 : i32
    %c8_i32_32 = arith.constant 8 : i32
    %106 = arith.muli %c2_i32, %c8_i32_32 : i32
    %107 = tpu.assume_multiple %106, 8 : i32
    %108 = arith.index_cast %107 : i32 to index
    %c0_33 = arith.constant 0 : index
    %109 = vector.load %arg9[%108, %c0_33] : memref<64x512xf32, #tpu.memory_space<vmem>>, vector<8x512xf32>
    %cst_34 = arith.constant dense<0.000000e+00> : vector<8x512xf32>
    %110 = tpu.matmul %100, %17, %cst_34 {dimension_numbers = #tpu.dot_dimension_numbers<[1], [0], [0], [1], [0, 0, 1, 1], [], []>} : vector<8x128xf32>, vector<128x512xf32>, vector<8x512xf32> -> vector<8x512xf32>
    %111 = arith.addf %109, %110 : vector<8x512xf32>
    %112 = vector.extract_strided_slice %111 {offsets = [0, 0], sizes = [8, 128], strides = [1, 1]} : vector<8x512xf32> to vector<8x128xf32>
    %113 = arith.negf %112 : vector<8x128xf32>
    %114 = math.exp %113 : vector<8x128xf32>
    %cst_35 = arith.constant 1.000000e+00 : f32
    %115 = vector.broadcast %cst_35 : f32 to vector<8x128xf32>
    %116 = arith.addf %115, %114 : vector<8x128xf32>
    %117 = arith.divf %115, %116 : vector<8x128xf32>
    %118 = vector.extract_strided_slice %111 {offsets = [0, 128], sizes = [8, 128], strides = [1, 1]} : vector<8x512xf32> to vector<8x128xf32>
    %119 = arith.negf %118 : vector<8x128xf32>
    %120 = math.exp %119 : vector<8x128xf32>
    %cst_36 = arith.constant 1.000000e+00 : f32
    %121 = vector.broadcast %cst_36 : f32 to vector<8x128xf32>
    %122 = arith.addf %121, %120 : vector<8x128xf32>
    %123 = arith.divf %121, %122 : vector<8x128xf32>
    %124 = vector.extract_strided_slice %111 {offsets = [0, 256], sizes = [8, 128], strides = [1, 1]} : vector<8x512xf32> to vector<8x128xf32>
    %125 = math.tanh %124 : vector<8x128xf32>
    %126 = vector.extract_strided_slice %111 {offsets = [0, 384], sizes = [8, 128], strides = [1, 1]} : vector<8x512xf32> to vector<8x128xf32>
    %127 = arith.negf %126 : vector<8x128xf32>
    %128 = math.exp %127 : vector<8x128xf32>
    %cst_37 = arith.constant 1.000000e+00 : f32
    %129 = vector.broadcast %cst_37 : f32 to vector<8x128xf32>
    %130 = arith.addf %129, %128 : vector<8x128xf32>
    %131 = arith.divf %129, %130 : vector<8x128xf32>
    %132 = arith.mulf %123, %105 : vector<8x128xf32>
    %133 = arith.mulf %117, %125 : vector<8x128xf32>
    %134 = arith.addf %132, %133 : vector<8x128xf32>
    %135 = math.tanh %134 : vector<8x128xf32>
    %136 = arith.mulf %131, %135 : vector<8x128xf32>
    %137 = arith.index_cast %107 : i32 to index
    %c0_38 = arith.constant 0 : index
    %138 = vector.load %arg10[%137, %c0_38] : memref<64x128xf32, #tpu.memory_space<vmem>>, vector<8x128xf32>
    %139 = arith.mulf %138, %136 : vector<8x128xf32>
    %cst_39 = arith.constant 1.000000e+00 : f32
    %140 = vector.broadcast %cst_39 : f32 to vector<8x128xf32>
    %141 = arith.subf %140, %138 : vector<8x128xf32>
    %142 = arith.mulf %141, %100 : vector<8x128xf32>
    %143 = arith.addf %139, %142 : vector<8x128xf32>
    %144 = arith.mulf %138, %134 : vector<8x128xf32>
    %cst_40 = arith.constant 1.000000e+00 : f32
    %145 = vector.broadcast %cst_40 : f32 to vector<8x128xf32>
    %146 = arith.subf %145, %138 : vector<8x128xf32>
    %147 = arith.mulf %146, %105 : vector<8x128xf32>
    %148 = arith.addf %144, %147 : vector<8x128xf32>
    %c3_i32 = arith.constant 3 : i32
    %c8_i32_41 = arith.constant 8 : i32
    %149 = arith.muli %c3_i32, %c8_i32_41 : i32
    %150 = tpu.assume_multiple %149, 8 : i32
    %151 = arith.index_cast %150 : i32 to index
    %c0_42 = arith.constant 0 : index
    %152 = vector.load %arg9[%151, %c0_42] : memref<64x512xf32, #tpu.memory_space<vmem>>, vector<8x512xf32>
    %cst_43 = arith.constant dense<0.000000e+00> : vector<8x512xf32>
    %153 = tpu.matmul %143, %17, %cst_43 {dimension_numbers = #tpu.dot_dimension_numbers<[1], [0], [0], [1], [0, 0, 1, 1], [], []>} : vector<8x128xf32>, vector<128x512xf32>, vector<8x512xf32> -> vector<8x512xf32>
    %154 = arith.addf %152, %153 : vector<8x512xf32>
    %155 = vector.extract_strided_slice %154 {offsets = [0, 0], sizes = [8, 128], strides = [1, 1]} : vector<8x512xf32> to vector<8x128xf32>
    %156 = arith.negf %155 : vector<8x128xf32>
    %157 = math.exp %156 : vector<8x128xf32>
    %cst_44 = arith.constant 1.000000e+00 : f32
    %158 = vector.broadcast %cst_44 : f32 to vector<8x128xf32>
    %159 = arith.addf %158, %157 : vector<8x128xf32>
    %160 = arith.divf %158, %159 : vector<8x128xf32>
    %161 = vector.extract_strided_slice %154 {offsets = [0, 128], sizes = [8, 128], strides = [1, 1]} : vector<8x512xf32> to vector<8x128xf32>
    %162 = arith.negf %161 : vector<8x128xf32>
    %163 = math.exp %162 : vector<8x128xf32>
    %cst_45 = arith.constant 1.000000e+00 : f32
    %164 = vector.broadcast %cst_45 : f32 to vector<8x128xf32>
    %165 = arith.addf %164, %163 : vector<8x128xf32>
    %166 = arith.divf %164, %165 : vector<8x128xf32>
    %167 = vector.extract_strided_slice %154 {offsets = [0, 256], sizes = [8, 128], strides = [1, 1]} : vector<8x512xf32> to vector<8x128xf32>
    %168 = math.tanh %167 : vector<8x128xf32>
    %169 = vector.extract_strided_slice %154 {offsets = [0, 384], sizes = [8, 128], strides = [1, 1]} : vector<8x512xf32> to vector<8x128xf32>
    %170 = arith.negf %169 : vector<8x128xf32>
    %171 = math.exp %170 : vector<8x128xf32>
    %cst_46 = arith.constant 1.000000e+00 : f32
    %172 = vector.broadcast %cst_46 : f32 to vector<8x128xf32>
    %173 = arith.addf %172, %171 : vector<8x128xf32>
    %174 = arith.divf %172, %173 : vector<8x128xf32>
    %175 = arith.mulf %166, %148 : vector<8x128xf32>
    %176 = arith.mulf %160, %168 : vector<8x128xf32>
    %177 = arith.addf %175, %176 : vector<8x128xf32>
    %178 = math.tanh %177 : vector<8x128xf32>
    %179 = arith.mulf %174, %178 : vector<8x128xf32>
    %180 = arith.index_cast %150 : i32 to index
    %c0_47 = arith.constant 0 : index
    %181 = vector.load %arg10[%180, %c0_47] : memref<64x128xf32, #tpu.memory_space<vmem>>, vector<8x128xf32>
    %182 = arith.mulf %181, %179 : vector<8x128xf32>
    %cst_48 = arith.constant 1.000000e+00 : f32
    %183 = vector.broadcast %cst_48 : f32 to vector<8x128xf32>
    %184 = arith.subf %183, %181 : vector<8x128xf32>
    %185 = arith.mulf %184, %143 : vector<8x128xf32>
    %186 = arith.addf %182, %185 : vector<8x128xf32>
    %187 = arith.mulf %181, %177 : vector<8x128xf32>
    %cst_49 = arith.constant 1.000000e+00 : f32
    %188 = vector.broadcast %cst_49 : f32 to vector<8x128xf32>
    %189 = arith.subf %188, %181 : vector<8x128xf32>
    %190 = arith.mulf %189, %148 : vector<8x128xf32>
    %191 = arith.addf %187, %190 : vector<8x128xf32>
    %c4_i32 = arith.constant 4 : i32
    %c8_i32_50 = arith.constant 8 : i32
    %192 = arith.muli %c4_i32, %c8_i32_50 : i32
    %193 = tpu.assume_multiple %192, 8 : i32
    %194 = arith.index_cast %193 : i32 to index
    %c0_51 = arith.constant 0 : index
    %195 = vector.load %arg9[%194, %c0_51] : memref<64x512xf32, #tpu.memory_space<vmem>>, vector<8x512xf32>
    %cst_52 = arith.constant dense<0.000000e+00> : vector<8x512xf32>
    %196 = tpu.matmul %186, %17, %cst_52 {dimension_numbers = #tpu.dot_dimension_numbers<[1], [0], [0], [1], [0, 0, 1, 1], [], []>} : vector<8x128xf32>, vector<128x512xf32>, vector<8x512xf32> -> vector<8x512xf32>
    %197 = arith.addf %195, %196 : vector<8x512xf32>
    %198 = vector.extract_strided_slice %197 {offsets = [0, 0], sizes = [8, 128], strides = [1, 1]} : vector<8x512xf32> to vector<8x128xf32>
    %199 = arith.negf %198 : vector<8x128xf32>
    %200 = math.exp %199 : vector<8x128xf32>
    %cst_53 = arith.constant 1.000000e+00 : f32
    %201 = vector.broadcast %cst_53 : f32 to vector<8x128xf32>
    %202 = arith.addf %201, %200 : vector<8x128xf32>
    %203 = arith.divf %201, %202 : vector<8x128xf32>
    %204 = vector.extract_strided_slice %197 {offsets = [0, 128], sizes = [8, 128], strides = [1, 1]} : vector<8x512xf32> to vector<8x128xf32>
    %205 = arith.negf %204 : vector<8x128xf32>
    %206 = math.exp %205 : vector<8x128xf32>
    %cst_54 = arith.constant 1.000000e+00 : f32
    %207 = vector.broadcast %cst_54 : f32 to vector<8x128xf32>
    %208 = arith.addf %207, %206 : vector<8x128xf32>
    %209 = arith.divf %207, %208 : vector<8x128xf32>
    %210 = vector.extract_strided_slice %197 {offsets = [0, 256], sizes = [8, 128], strides = [1, 1]} : vector<8x512xf32> to vector<8x128xf32>
    %211 = math.tanh %210 : vector<8x128xf32>
    %212 = vector.extract_strided_slice %197 {offsets = [0, 384], sizes = [8, 128], strides = [1, 1]} : vector<8x512xf32> to vector<8x128xf32>
    %213 = arith.negf %212 : vector<8x128xf32>
    %214 = math.exp %213 : vector<8x128xf32>
    %cst_55 = arith.constant 1.000000e+00 : f32
    %215 = vector.broadcast %cst_55 : f32 to vector<8x128xf32>
    %216 = arith.addf %215, %214 : vector<8x128xf32>
    %217 = arith.divf %215, %216 : vector<8x128xf32>
    %218 = arith.mulf %209, %191 : vector<8x128xf32>
    %219 = arith.mulf %203, %211 : vector<8x128xf32>
    %220 = arith.addf %218, %219 : vector<8x128xf32>
    %221 = math.tanh %220 : vector<8x128xf32>
    %222 = arith.mulf %217, %221 : vector<8x128xf32>
    %223 = arith.index_cast %193 : i32 to index
    %c0_56 = arith.constant 0 : index
    %224 = vector.load %arg10[%223, %c0_56] : memref<64x128xf32, #tpu.memory_space<vmem>>, vector<8x128xf32>
    %225 = arith.mulf %224, %222 : vector<8x128xf32>
    %cst_57 = arith.constant 1.000000e+00 : f32
    %226 = vector.broadcast %cst_57 : f32 to vector<8x128xf32>
    %227 = arith.subf %226, %224 : vector<8x128xf32>
    %228 = arith.mulf %227, %186 : vector<8x128xf32>
    %229 = arith.addf %225, %228 : vector<8x128xf32>
    %230 = arith.mulf %224, %220 : vector<8x128xf32>
    %cst_58 = arith.constant 1.000000e+00 : f32
    %231 = vector.broadcast %cst_58 : f32 to vector<8x128xf32>
    %232 = arith.subf %231, %224 : vector<8x128xf32>
    %233 = arith.mulf %232, %191 : vector<8x128xf32>
    %234 = arith.addf %230, %233 : vector<8x128xf32>
    %c5_i32 = arith.constant 5 : i32
    %c8_i32_59 = arith.constant 8 : i32
    %235 = arith.muli %c5_i32, %c8_i32_59 : i32
    %236 = tpu.assume_multiple %235, 8 : i32
    %237 = arith.index_cast %236 : i32 to index
    %c0_60 = arith.constant 0 : index
    %238 = vector.load %arg9[%237, %c0_60] : memref<64x512xf32, #tpu.memory_space<vmem>>, vector<8x512xf32>
    %cst_61 = arith.constant dense<0.000000e+00> : vector<8x512xf32>
    %239 = tpu.matmul %229, %17, %cst_61 {dimension_numbers = #tpu.dot_dimension_numbers<[1], [0], [0], [1], [0, 0, 1, 1], [], []>} : vector<8x128xf32>, vector<128x512xf32>, vector<8x512xf32> -> vector<8x512xf32>
    %240 = arith.addf %238, %239 : vector<8x512xf32>
    %241 = vector.extract_strided_slice %240 {offsets = [0, 0], sizes = [8, 128], strides = [1, 1]} : vector<8x512xf32> to vector<8x128xf32>
    %242 = arith.negf %241 : vector<8x128xf32>
    %243 = math.exp %242 : vector<8x128xf32>
    %cst_62 = arith.constant 1.000000e+00 : f32
    %244 = vector.broadcast %cst_62 : f32 to vector<8x128xf32>
    %245 = arith.addf %244, %243 : vector<8x128xf32>
    %246 = arith.divf %244, %245 : vector<8x128xf32>
    %247 = vector.extract_strided_slice %240 {offsets = [0, 128], sizes = [8, 128], strides = [1, 1]} : vector<8x512xf32> to vector<8x128xf32>
    %248 = arith.negf %247 : vector<8x128xf32>
    %249 = math.exp %248 : vector<8x128xf32>
    %cst_63 = arith.constant 1.000000e+00 : f32
    %250 = vector.broadcast %cst_63 : f32 to vector<8x128xf32>
    %251 = arith.addf %250, %249 : vector<8x128xf32>
    %252 = arith.divf %250, %251 : vector<8x128xf32>
    %253 = vector.extract_strided_slice %240 {offsets = [0, 256], sizes = [8, 128], strides = [1, 1]} : vector<8x512xf32> to vector<8x128xf32>
    %254 = math.tanh %253 : vector<8x128xf32>
    %255 = vector.extract_strided_slice %240 {offsets = [0, 384], sizes = [8, 128], strides = [1, 1]} : vector<8x512xf32> to vector<8x128xf32>
    %256 = arith.negf %255 : vector<8x128xf32>
    %257 = math.exp %256 : vector<8x128xf32>
    %cst_64 = arith.constant 1.000000e+00 : f32
    %258 = vector.broadcast %cst_64 : f32 to vector<8x128xf32>
    %259 = arith.addf %258, %257 : vector<8x128xf32>
    %260 = arith.divf %258, %259 : vector<8x128xf32>
    %261 = arith.mulf %252, %234 : vector<8x128xf32>
    %262 = arith.mulf %246, %254 : vector<8x128xf32>
    %263 = arith.addf %261, %262 : vector<8x128xf32>
    %264 = math.tanh %263 : vector<8x128xf32>
    %265 = arith.mulf %260, %264 : vector<8x128xf32>
    %266 = arith.index_cast %236 : i32 to index
    %c0_65 = arith.constant 0 : index
    %267 = vector.load %arg10[%266, %c0_65] : memref<64x128xf32, #tpu.memory_space<vmem>>, vector<8x128xf32>
    %268 = arith.mulf %267, %265 : vector<8x128xf32>
    %cst_66 = arith.constant 1.000000e+00 : f32
    %269 = vector.broadcast %cst_66 : f32 to vector<8x128xf32>
    %270 = arith.subf %269, %267 : vector<8x128xf32>
    %271 = arith.mulf %270, %229 : vector<8x128xf32>
    %272 = arith.addf %268, %271 : vector<8x128xf32>
    %273 = arith.mulf %267, %263 : vector<8x128xf32>
    %cst_67 = arith.constant 1.000000e+00 : f32
    %274 = vector.broadcast %cst_67 : f32 to vector<8x128xf32>
    %275 = arith.subf %274, %267 : vector<8x128xf32>
    %276 = arith.mulf %275, %234 : vector<8x128xf32>
    %277 = arith.addf %273, %276 : vector<8x128xf32>
    %c6_i32 = arith.constant 6 : i32
    %c8_i32_68 = arith.constant 8 : i32
    %278 = arith.muli %c6_i32, %c8_i32_68 : i32
    %279 = tpu.assume_multiple %278, 8 : i32
    %280 = arith.index_cast %279 : i32 to index
    %c0_69 = arith.constant 0 : index
    %281 = vector.load %arg9[%280, %c0_69] : memref<64x512xf32, #tpu.memory_space<vmem>>, vector<8x512xf32>
    %cst_70 = arith.constant dense<0.000000e+00> : vector<8x512xf32>
    %282 = tpu.matmul %272, %17, %cst_70 {dimension_numbers = #tpu.dot_dimension_numbers<[1], [0], [0], [1], [0, 0, 1, 1], [], []>} : vector<8x128xf32>, vector<128x512xf32>, vector<8x512xf32> -> vector<8x512xf32>
    %283 = arith.addf %281, %282 : vector<8x512xf32>
    %284 = vector.extract_strided_slice %283 {offsets = [0, 0], sizes = [8, 128], strides = [1, 1]} : vector<8x512xf32> to vector<8x128xf32>
    %285 = arith.negf %284 : vector<8x128xf32>
    %286 = math.exp %285 : vector<8x128xf32>
    %cst_71 = arith.constant 1.000000e+00 : f32
    %287 = vector.broadcast %cst_71 : f32 to vector<8x128xf32>
    %288 = arith.addf %287, %286 : vector<8x128xf32>
    %289 = arith.divf %287, %288 : vector<8x128xf32>
    %290 = vector.extract_strided_slice %283 {offsets = [0, 128], sizes = [8, 128], strides = [1, 1]} : vector<8x512xf32> to vector<8x128xf32>
    %291 = arith.negf %290 : vector<8x128xf32>
    %292 = math.exp %291 : vector<8x128xf32>
    %cst_72 = arith.constant 1.000000e+00 : f32
    %293 = vector.broadcast %cst_72 : f32 to vector<8x128xf32>
    %294 = arith.addf %293, %292 : vector<8x128xf32>
    %295 = arith.divf %293, %294 : vector<8x128xf32>
    %296 = vector.extract_strided_slice %283 {offsets = [0, 256], sizes = [8, 128], strides = [1, 1]} : vector<8x512xf32> to vector<8x128xf32>
    %297 = math.tanh %296 : vector<8x128xf32>
    %298 = vector.extract_strided_slice %283 {offsets = [0, 384], sizes = [8, 128], strides = [1, 1]} : vector<8x512xf32> to vector<8x128xf32>
    %299 = arith.negf %298 : vector<8x128xf32>
    %300 = math.exp %299 : vector<8x128xf32>
    %cst_73 = arith.constant 1.000000e+00 : f32
    %301 = vector.broadcast %cst_73 : f32 to vector<8x128xf32>
    %302 = arith.addf %301, %300 : vector<8x128xf32>
    %303 = arith.divf %301, %302 : vector<8x128xf32>
    %304 = arith.mulf %295, %277 : vector<8x128xf32>
    %305 = arith.mulf %289, %297 : vector<8x128xf32>
    %306 = arith.addf %304, %305 : vector<8x128xf32>
    %307 = math.tanh %306 : vector<8x128xf32>
    %308 = arith.mulf %303, %307 : vector<8x128xf32>
    %309 = arith.index_cast %279 : i32 to index
    %c0_74 = arith.constant 0 : index
    %310 = vector.load %arg10[%309, %c0_74] : memref<64x128xf32, #tpu.memory_space<vmem>>, vector<8x128xf32>
    %311 = arith.mulf %310, %308 : vector<8x128xf32>
    %cst_75 = arith.constant 1.000000e+00 : f32
    %312 = vector.broadcast %cst_75 : f32 to vector<8x128xf32>
    %313 = arith.subf %312, %310 : vector<8x128xf32>
    %314 = arith.mulf %313, %272 : vector<8x128xf32>
    %315 = arith.addf %311, %314 : vector<8x128xf32>
    %316 = arith.mulf %310, %306 : vector<8x128xf32>
    %cst_76 = arith.constant 1.000000e+00 : f32
    %317 = vector.broadcast %cst_76 : f32 to vector<8x128xf32>
    %318 = arith.subf %317, %310 : vector<8x128xf32>
    %319 = arith.mulf %318, %277 : vector<8x128xf32>
    %320 = arith.addf %316, %319 : vector<8x128xf32>
    %c7_i32 = arith.constant 7 : i32
    %c8_i32_77 = arith.constant 8 : i32
    %321 = arith.muli %c7_i32, %c8_i32_77 : i32
    %322 = tpu.assume_multiple %321, 8 : i32
    %323 = arith.index_cast %322 : i32 to index
    %c0_78 = arith.constant 0 : index
    %324 = vector.load %arg9[%323, %c0_78] : memref<64x512xf32, #tpu.memory_space<vmem>>, vector<8x512xf32>
    %cst_79 = arith.constant dense<0.000000e+00> : vector<8x512xf32>
    %325 = tpu.matmul %315, %17, %cst_79 {dimension_numbers = #tpu.dot_dimension_numbers<[1], [0], [0], [1], [0, 0, 1, 1], [], []>} : vector<8x128xf32>, vector<128x512xf32>, vector<8x512xf32> -> vector<8x512xf32>
    %326 = arith.addf %324, %325 : vector<8x512xf32>
    %327 = vector.extract_strided_slice %326 {offsets = [0, 0], sizes = [8, 128], strides = [1, 1]} : vector<8x512xf32> to vector<8x128xf32>
    %328 = arith.negf %327 : vector<8x128xf32>
    %329 = math.exp %328 : vector<8x128xf32>
    %cst_80 = arith.constant 1.000000e+00 : f32
    %330 = vector.broadcast %cst_80 : f32 to vector<8x128xf32>
    %331 = arith.addf %330, %329 : vector<8x128xf32>
    %332 = arith.divf %330, %331 : vector<8x128xf32>
    %333 = vector.extract_strided_slice %326 {offsets = [0, 128], sizes = [8, 128], strides = [1, 1]} : vector<8x512xf32> to vector<8x128xf32>
    %334 = arith.negf %333 : vector<8x128xf32>
    %335 = math.exp %334 : vector<8x128xf32>
    %cst_81 = arith.constant 1.000000e+00 : f32
    %336 = vector.broadcast %cst_81 : f32 to vector<8x128xf32>
    %337 = arith.addf %336, %335 : vector<8x128xf32>
    %338 = arith.divf %336, %337 : vector<8x128xf32>
    %339 = vector.extract_strided_slice %326 {offsets = [0, 256], sizes = [8, 128], strides = [1, 1]} : vector<8x512xf32> to vector<8x128xf32>
    %340 = math.tanh %339 : vector<8x128xf32>
    %341 = vector.extract_strided_slice %326 {offsets = [0, 384], sizes = [8, 128], strides = [1, 1]} : vector<8x512xf32> to vector<8x128xf32>
    %342 = arith.negf %341 : vector<8x128xf32>
    %343 = math.exp %342 : vector<8x128xf32>
    %cst_82 = arith.constant 1.000000e+00 : f32
    %344 = vector.broadcast %cst_82 : f32 to vector<8x128xf32>
    %345 = arith.addf %344, %343 : vector<8x128xf32>
    %346 = arith.divf %344, %345 : vector<8x128xf32>
    %347 = arith.mulf %338, %320 : vector<8x128xf32>
    %348 = arith.mulf %332, %340 : vector<8x128xf32>
    %349 = arith.addf %347, %348 : vector<8x128xf32>
    %350 = math.tanh %349 : vector<8x128xf32>
    %351 = arith.mulf %346, %350 : vector<8x128xf32>
    %352 = arith.index_cast %322 : i32 to index
    %c0_83 = arith.constant 0 : index
    %353 = vector.load %arg10[%352, %c0_83] : memref<64x128xf32, #tpu.memory_space<vmem>>, vector<8x128xf32>
    %354 = arith.mulf %353, %351 : vector<8x128xf32>
    %cst_84 = arith.constant 1.000000e+00 : f32
    %355 = vector.broadcast %cst_84 : f32 to vector<8x128xf32>
    %356 = arith.subf %355, %353 : vector<8x128xf32>
    %357 = arith.mulf %356, %315 : vector<8x128xf32>
    %358 = arith.addf %354, %357 : vector<8x128xf32>
    %359 = arith.mulf %353, %349 : vector<8x128xf32>
    %cst_85 = arith.constant 1.000000e+00 : f32
    %360 = vector.broadcast %cst_85 : f32 to vector<8x128xf32>
    %361 = arith.subf %360, %353 : vector<8x128xf32>
    %362 = arith.mulf %361, %320 : vector<8x128xf32>
    %363 = arith.addf %359, %362 : vector<8x128xf32>
    %c8_i32_86 = arith.constant 8 : i32
    %c0_87 = arith.constant 0 : index
    %c0_88 = arith.constant 0 : index
    %364 = vector.load %arg4[%c0_87, %c0_88] : memref<128x128xf32, #tpu.memory_space<vmem>>, vector<128x128xf32>
    %cst_89 = arith.constant dense<0.000000e+00> : vector<8x128xf32>
    %365 = tpu.matmul %358, %364, %cst_89 {dimension_numbers = #tpu.dot_dimension_numbers<[1], [0], [0], [1], [0, 0, 1, 1], [], []>} : vector<8x128xf32>, vector<128x128xf32>, vector<8x128xf32> -> vector<8x128xf32>
    %c0_90 = arith.constant 0 : index
    %c0_91 = arith.constant 0 : index
    %366 = vector.load %arg5[%c0_90, %c0_91] : memref<1x128xf32, #tpu.memory_space<vmem>>, vector<1x128xf32>
    %367 = vector.broadcast %366 : vector<1x128xf32> to vector<8x128xf32>
    %368 = arith.addf %365, %367 : vector<8x128xf32>
    %369 = math.tanh %368 : vector<8x128xf32>
    %c0_92 = arith.constant 0 : index
    %c0_93 = arith.constant 0 : index
    %370 = vector.load %arg6[%c0_92, %c0_93] : memref<128x128xf32, #tpu.memory_space<vmem>>, vector<128x128xf32>
    %cst_94 = arith.constant dense<0.000000e+00> : vector<8x128xf32>
    %371 = tpu.matmul %369, %370, %cst_94 {dimension_numbers = #tpu.dot_dimension_numbers<[1], [0], [0], [1], [0, 0, 1, 1], [], []>} : vector<8x128xf32>, vector<128x128xf32>, vector<8x128xf32> -> vector<8x128xf32>
    %c0_95 = arith.constant 0 : index
    %c0_96 = arith.constant 0 : index
    %372 = vector.load %arg7[%c0_95, %c0_96] : memref<1x128xf32, #tpu.memory_space<vmem>>, vector<1x128xf32>
    %373 = vector.broadcast %372 : vector<1x128xf32> to vector<8x128xf32>
    %374 = arith.addf %371, %373 : vector<8x128xf32>
    %375 = tpu.iota {dimensions = array<i32: 1>} : vector<8x128xi32>
    %c32_i32 = arith.constant 32 : i32
    %376 = vector.broadcast %c32_i32 : i32 to vector<8x128xi32>
    %377 = arith.cmpi sge, %375, %376 : vector<8x128xi32>
    %cst_97 = arith.constant 0.000000e+00 : f32
    %378 = vector.broadcast %cst_97 : f32 to vector<8x128xf32>
    %379 = arith.maximumf %374, %378 : vector<8x128xf32>
    %380 = math.absf %374 : vector<8x128xf32>
    %cst_98 = arith.constant 0.000000e+00 : f32
    %381 = vector.broadcast %cst_98 : f32 to vector<8x128xf32>
    %382 = arith.subf %381, %380 : vector<8x128xf32>
    %383 = math.exp %382 : vector<8x128xf32>
    %cst_99 = arith.constant 1.000000e+00 : f32
    %384 = vector.broadcast %cst_99 : f32 to vector<8x128xf32>
    %385 = arith.addf %384, %383 : vector<8x128xf32>
    %386 = math.log %385 : vector<8x128xf32>
    %387 = arith.addf %379, %386 : vector<8x128xf32>
    %388 = arith.select %377, %387, %374 : vector<8x128xi1>, vector<8x128xf32>
    %c0_100 = arith.constant 0 : index
    %c0_101 = arith.constant 0 : index
    %389 = vector.load %arg8[%c0_100, %c0_101] : memref<8x128xf32, #tpu.memory_space<vmem>>, vector<8x128xf32>
    tpu.vector_store %arg8[%c0_100, %c0_101], %388 {strides = array<i32>} : memref<8x128xf32, #tpu.memory_space<vmem>>, vector<8x128xf32>,
    return
  }
}

</mosaic_0001>

<llo_original>
// kernel: encoder_z0_ode_rnn_forward.1
$region0: #{encoder_z0_ode_rnn_forward.1}
  #allocation0 [shape = 'u32[]', space=smem, size = 0x4, offset = 0x4, fixed_abs, tag = 'smem constant byte address 0x4 - core index']
  #allocation1 [shape = 'u32[144,128]{1,0:T(1,128)}', space=vmem, size = 0x12000, scoped, tag = 'internal scratch']
  #allocation2 [shape = 'f32[64,512]{1,0:T(8,128)}', space=vmem, size = 0x20000, scoped, tag = 'scratch operand']
  #allocation3 [shape = 'f32[64,128]{1,0:T(8,128)}', space=vmem, size = 0x8000, scoped, tag = 'scratch operand']
  %s0 = inlined_call_operand.vmem [shape: f32[64,16], index: 0, kind: input, shape index: {}]
  %s1 = inlined_call_operand.vmem [shape: f32[16,512], index: 1, kind: input, shape index: {}]
  %s2 = inlined_call_operand.hbm [shape: f32[128,512], index: 2, kind: input, shape index: {}]
  %s3 = inlined_call_operand.vmem [shape: f32[1,512], index: 3, kind: input, shape index: {}]
  %s4 = inlined_call_operand.vmem [shape: f32[128,128], index: 4, kind: input, shape index: {}]
  %s5 = inlined_call_operand.vmem [shape: f32[1,128], index: 5, kind: input, shape index: {}]
  %s6 = inlined_call_operand.hbm [shape: f32[128,128], index: 6, kind: input, shape index: {}]
  %s7 = inlined_call_operand.vmem [shape: f32[1,128], index: 7, kind: input, shape index: {}]
  %s8 = inlined_call_operand.vmem [shape: f32[8,128], index: 8, kind: output, shape index: {}]
  %s9 = sld [smem:[#allocation0]]
  $region50: #{encoder_z0_ode_rnn_forward.1} parent=0
    _
  %s11 = ssub.s32 1, %s9
  %s12 = scalar_select 0, %s11, %s9
  $region1: #{encoder_z0_ode_rnn_forward.1} parent=0
    #allocation4 [shape = 'u8[262144]{0}', space=vmem, size = 0x40000, scoped, tag = 'input window, operand 2, single buffered']
    #allocation5 [shape = 's32[1]{0}', space=sflag, size = 0x4, scoped, tag = 'scoped memory for encoder_z0_ode_rnn_forward.1']
    #allocation6 [shape = 'u8[65536]{0}', space=vmem, size = 0x10000, scoped, tag = 'input window, operand 6, single buffered']
    #allocation7 [shape = 's32[1]{0}', space=sflag, size = 0x4, scoped, tag = 'scoped memory for encoder_z0_ode_rnn_forward.1']
    %13 = vsyncpa [#allocation5], 0
    %14 = vsyncpa [#allocation7], 0
    // Predicated region
    $region2: #{encoder_z0_ode_rnn_forward.1} parent=1 // pred_check
      _
    $region3: #{encoder_z0_ode_rnn_forward.1} parent=1 // pred_check_branch
      %16 = sbr.rel (0) target = $region5
    $region4: #{encoder_z0_ode_rnn_forward.1} parent=1 // pred_region
      _
    $region5: #{encoder_z0_ode_rnn_forward.1} parent=1 // pred_fallthru
      _
    // Predicated region
    $region6: #{encoder_z0_ode_rnn_forward.1} parent=1 // pred_check
      _
    $region7: #{encoder_z0_ode_rnn_forward.1} parent=1 // pred_check_branch
      %18 = sbr.rel (0) target = $region9
    $region8: #{encoder_z0_ode_rnn_forward.1} parent=1 // pred_region
      _
    $region9: #{encoder_z0_ode_rnn_forward.1} parent=1 // pred_fallthru
      _
    // Predicated region
    $region10: #{encoder_z0_ode_rnn_forward.1} parent=1 // pred_check
      _
    $region11: #{encoder_z0_ode_rnn_forward.1} parent=1 // pred_check_branch
      %20 = sbr.rel (0) target = $region13
    $region12: #{encoder_z0_ode_rnn_forward.1} parent=1 // pred_region
      %s22 = ssub.s32 8192, 8192
      %23 = vsyncadd [#allocation5], %s22
      %s24 = sshll.u32 [#allocation4], 4
      %s25 = int_to_ptr.vmem [resolvable:$true] %s24
      %30 = dma.hbm_to_vmem [thread:$0]  %s2, 8192, %s25, [#allocation5], 512, 512, 32
    $region13: #{encoder_z0_ode_rnn_forward.1} parent=1 // pred_fallthru
      _
    // Predicated region
    $region14: #{encoder_z0_ode_rnn_forward.1} parent=1 // pred_check
      _
    $region15: #{encoder_z0_ode_rnn_forward.1} parent=1 // pred_check_branch
      %32 = sbr.rel (0) target = $region17
    $region16: #{encoder_z0_ode_rnn_forward.1} parent=1 // pred_region
      _
    $region17: #{encoder_z0_ode_rnn_forward.1} parent=1 // pred_fallthru
      _
    // Predicated region
    $region18: #{encoder_z0_ode_rnn_forward.1} parent=1 // pred_check
      _
    $region19: #{encoder_z0_ode_rnn_forward.1} parent=1 // pred_check_branch
      %34 = sbr.rel (0) target = $region21
    $region20: #{encoder_z0_ode_rnn_forward.1} parent=1 // pred_region
      _
    $region21: #{encoder_z0_ode_rnn_forward.1} parent=1 // pred_fallthru
      _
    // Predicated region
    $region22: #{encoder_z0_ode_rnn_forward.1} parent=1 // pred_check
      _
    $region23: #{encoder_z0_ode_rnn_forward.1} parent=1 // pred_check_branch
      %36 = sbr.rel (0) target = $region25
    $region24: #{encoder_z0_ode_rnn_forward.1} parent=1 // pred_region
      _
    $region25: #{encoder_z0_ode_rnn_forward.1} parent=1 // pred_fallthru
      _
    // Predicated region
    $region26: #{encoder_z0_ode_rnn_forward.1} parent=1 // pred_check
      _
    $region27: #{encoder_z0_ode_rnn_forward.1} parent=1 // pred_check_branch
      %38 = sbr.rel (0) target = $region29
    $region28: #{encoder_z0_ode_rnn_forward.1} parent=1 // pred_region
      %s40 = ssub.s32 2048, 2048
      %41 = vsyncadd [#allocation7], %s40
      %s42 = sshll.u32 [#allocation6], 4
      %s43 = int_to_ptr.vmem [resolvable:$true] %s42
      %48 = dma.hbm_to_vmem [thread:$0]  %s6, 2048, %s43, [#allocation7], 128, 128, 8
    $region29: #{encoder_z0_ode_rnn_forward.1} parent=1 // pred_fallthru
      _
    // Predicated region
    $region30: #{encoder_z0_ode_rnn_forward.1} parent=1 // pred_check
      _
    $region31: #{encoder_z0_ode_rnn_forward.1} parent=1 // pred_check_branch
      %50 = sbr.rel (0) target = $region33
    $region32: #{encoder_z0_ode_rnn_forward.1} parent=1 // pred_region
      _
    $region33: #{encoder_z0_ode_rnn_forward.1} parent=1 // pred_fallthru
      _
    // Predicated region
    $region34: #{encoder_z0_ode_rnn_forward.1} parent=1 // pred_check
      _
    $region35: #{encoder_z0_ode_rnn_forward.1} parent=1 // pred_check_branch
      %52 = sbr.rel (0) target = $region37
    $region36: #{encoder_z0_ode_rnn_forward.1} parent=1 // pred_region
      %53 = dma.done [#allocation5], 8192
    $region37: #{encoder_z0_ode_rnn_forward.1} parent=1 // pred_fallthru
      _
    // Predicated region
    $region38: #{encoder_z0_ode_rnn_forward.1} parent=1 // pred_check
      _
    $region39: #{encoder_z0_ode_rnn_forward.1} parent=1 // pred_check_branch
      %55 = sbr.rel (0) target = $region41
    $region40: #{encoder_z0_ode_rnn_forward.1} parent=1 // pred_region
      %56 = dma.done [#allocation7], 2048
    $region41: #{encoder_z0_ode_rnn_forward.1} parent=1 // pred_fallthru
      _
    %v57 = vld [vmem:[%s0] sm:$0xff]
    %v58 = vld [vmem:[%s0 + $0x8] sm:$0xff]
    %v59 = vld [vmem:[%s0 + $0x10] sm:$0xff]
    %v60 = vld [vmem:[%s0 + $0x18] sm:$0xff]
    %v61 = vld [vmem:[%s0 + $0x20] sm:$0xff]
    %v62 = vld [vmem:[%s0 + $0x28] sm:$0xff]
    %v63 = vld [vmem:[%s0 + $0x30] sm:$0xff]
    %v64 = vld [vmem:[%s0 + $0x38] sm:$0xff]
    %v65 = vld [vmem:[%s1] sm:$0xff]
    %v66 = vld [vmem:[%s1 + $0x8] sm:$0xff]
    %v67 = vld [vmem:[%s1 + $0x10] sm:$0xff]
    %v68 = vld [vmem:[%s1 + $0x18] sm:$0xff]
    %v69 = vld [vmem:[%s1 + $0x20] sm:$0xff]
    %v70 = vld [vmem:[%s1 + $0x28] sm:$0xff]
    %v71 = vld [vmem:[%s1 + $0x30] sm:$0xff]
    %v72 = vld [vmem:[%s1 + $0x38] sm:$0xff]
    %v73 = vld [vmem:[%s3] sm:$0xf]
    %v75 = vlaneseq
    %v76 = vshrl.u32 %v75, 7
    %v77 = vsub.s32 0, %v76
    %v78 = vrot.slane %v73, %v77
    %v79 = vlaneseq
    %v80 = vshrl.u32 %v79, 7
    %v81 = vsub.s32 1, %v80
    %v82 = vrot.slane %v73, %v81
    %v83 = vlaneseq
    %v84 = vshrl.u32 %v83, 7
    %v85 = vsub.s32 2, %v84
    %v86 = vrot.slane %v73, %v85
    %v87 = vlaneseq
    %v88 = vshrl.u32 %v87, 7
    %v89 = vsub.s32 3, %v88
    %v90 = vrot.slane %v73, %v89
    %vm95 = vcmask 130048
    %v97 = vsel %vm95, %v57, 0
    %v100 = vsel %vm95, %v58, 0
    %v103 = vsel %vm95, %v59, 0
    %v106 = vsel %vm95, %v60, 0
    %v109 = vsel %vm95, %v61, 0
    %v112 = vsel %vm95, %v62, 0
    %v115 = vsel %vm95, %v63, 0
    %v118 = vsel %vm95, %v64, 0
    %120 = vmatprep.subr.mxu0 %v66
    %121 = vmatpush1.msra.mxu0 %v65
    %122 = vmatprep.subr.mxu0 %v70
    %123 = vmatpush1.msra.mxu0 %v69
    %124 = vmatprep.subr.mxu0 0.0
    %125 = vmatpush1.msra.mxu0 0.0
    %126 = vmatprep.subr.mxu0 0.0
    %127 = vmatpush1.msra.mxu0 0.0
    %128 = vmatprep.subr.mxu0 0.0
    %129 = vmatpush1.msra.mxu0 0.0
    %130 = vmatprep.subr.mxu0 0.0
    %131 = vmatpush1.msra.mxu0 0.0
    %132 = vmatprep.subr.mxu0 0.0
    %133 = vmatpush1.msra.mxu0 0.0
    %134 = vmatprep.subr.mxu0 0.0
    %135 = vmatpush1.msra.mxu0 0.0
    %136 = vmatprep.subr.mxu0 0.0
    %137 = vmatpush1.msra.mxu0 0.0
    %138 = vmatprep.subr.mxu0 0.0
    %139 = vmatpush1.msra.mxu0 0.0
    %140 = vmatprep.subr.mxu0 0.0
    %141 = vmatpush1.msra.mxu0 0.0
    %142 = vmatprep.subr.mxu0 0.0
    %143 = vmatpush1.msra.mxu0 0.0
    %144 = vmatprep.subr.mxu0 0.0
    %145 = vmatpush1.msra.mxu0 0.0
    %146 = vmatprep.subr.mxu0 0.0
    %147 = vmatpush1.msra.mxu0 0.0
    %148 = vmatprep.subr.mxu0 0.0
    %149 = vmatpush1.msra.mxu0 0.0
    %150 = vmatprep.subr.mxu0 0.0
    %151 = vmatpush1.msra.mxu0 0.0
    %152 = vmatprep.subr.mxu0 0.0
    %153 = vmatpush1.msra.mxu0 0.0
    %154 = vmatprep.subr.mxu0 0.0
    %155 = vmatpush1.msra.mxu0 0.0
    %156 = vmatprep.subr.mxu0 0.0
    %157 = vmatpush1.msra.mxu0 0.0
    %158 = vmatprep.subr.mxu0 0.0
    %159 = vmatpush1.msra.mxu0 0.0
    %160 = vmatprep.subr.mxu0 0.0
    %161 = vmatpush1.msra.mxu0 0.0
    %162 = vmatprep.subr.mxu0 0.0
    %163 = vmatpush1.msra.mxu0 0.0
    %164 = vmatprep.subr.mxu0 0.0
    %165 = vmatpush1.msra.mxu0 0.0
    %166 = vmatprep.subr.mxu0 0.0
    %167 = vmatpush1.msra.mxu0 0.0
    %168 = vmatprep.subr.mxu0 0.0
    %169 = vmatpush1.msra.mxu0 0.0
    %170 = vmatprep.subr.mxu0 0.0
    %171 = vmatpush1.msra.mxu0 0.0
    %172 = vmatprep.subr.mxu0 0.0
    %173 = vmatpush1.msra.mxu0 0.0
    %174 = vmatprep.subr.mxu0 0.0
    %175 = vmatpush1.msra.mxu0 0.0
    %176 = vmatprep.subr.mxu0 0.0
    %177 = vmatpush1.msra.mxu0 0.0
    %178 = vmatprep.subr.mxu0 0.0
    %179 = vmatpush1.msra.mxu0 0.0
    %180 = vmatprep.subr.mxu0 0.0
    %181 = vmatpush1.msra.mxu0 0.0
    %182 = vmatprep.subr.mxu0 0.0
    %183 = vmatpush1.msra.mxu0 0.0
    %184 = vmatprep.mubr.f32.mxu0 0.0
    %185 = vmatmul.mubr.f32.gmra.mrb[0].mxu0 %v97
    %v186 = vpop.f32.mrb[0].mxu0
    %v187 = vadd.f32 %v78, %v186
    %v188 = vpop.f32.mrb[0].mxu0
    %v189 = vadd.f32 %v82, %v188
    %190 = vmatprep.mubr.f32.mxu0 0.0
    %191 = vmatmul.mubr.f32.gmra.mrb[0].mxu0 %v100
    %v192 = vpop.f32.mrb[0].mxu0
    %v193 = vadd.f32 %v78, %v192
    %v194 = vpop.f32.mrb[0].mxu0
    %v195 = vadd.f32 %v82, %v194
    %196 = vmatprep.mubr.f32.mxu0 0.0
    %197 = vmatmul.mubr.f32.gmra.mrb[0].mxu0 %v103
    %v198 = vpop.f32.mrb[0].mxu0
    %v199 = vadd.f32 %v78, %v198
    %v200 = vpop.f32.mrb[0].mxu0
    %v201 = vadd.f32 %v82, %v200
    %202 = vmatprep.mubr.f32.mxu0 0.0
    %203 = vmatmul.mubr.f32.gmra.mrb[0].mxu0 %v106
    %v204 = vpop.f32.mrb[0].mxu0
    %v205 = vadd.f32 %v78, %v204
    %v206 = vpop.f32.mrb[0].mxu0
    %v207 = vadd.f32 %v82, %v206
    %208 = vmatprep.mubr.f32.mxu0 0.0
    %209 = vmatmul.mubr.f32.gmra.mrb[0].mxu0 %v109
    %v210 = vpop.f32.mrb[0].mxu0
    %v211 = vadd.f32 %v78, %v210
    %v212 = vpop.f32.mrb[0].mxu0
    %v213 = vadd.f32 %v82, %v212
    %214 = vmatprep.mubr.f32.mxu0 0.0
    %215 = vmatmul.mubr.f32.gmra.mrb[0].mxu0 %v112
    %v216 = vpop.f32.mrb[0].mxu0
    %v217 = vadd.f32 %v78, %v216
    %v218 = vpop.f32.mrb[0].mxu0
    %v219 = vadd.f32 %v82, %v218
    %220 = vmatprep.mubr.f32.mxu0 0.0
    %221 = vmatmul.mubr.f32.gmra.mrb[0].mxu0 %v115
    %v222 = vpop.f32.mrb[0].mxu0
    %v223 = vadd.f32 %v78, %v222
    %v224 = vpop.f32.mrb[0].mxu0
    %v225 = vadd.f32 %v82, %v224
    %226 = vmatprep.mubr.f32.mxu0 0.0
    %227 = vmatmul.mubr.f32.gmra.mrb[0].mxu0 %v118
    %v228 = vpop.f32.mrb[0].mxu0
    %v229 = vadd.f32 %v78, %v228
    %v230 = vpop.f32.mrb[0].mxu0
    %v231 = vadd.f32 %v82, %v230
    %232 = vdwg.mxu0
    %233 = vmatprep.subr.mxu0 %v68
    %234 = vmatpush1.msra.mxu0 %v67
    %235 = vmatprep.subr.mxu0 %v72
    %236 = vmatpush1.msra.mxu0 %v71
    %237 = vmatprep.subr.mxu0 0.0
    %238 = vmatpush1.msra.mxu0 0.0
    %239 = vmatprep.subr.mxu0 0.0
    %240 = vmatpush1.msra.mxu0 0.0
    %241 = vmatprep.subr.mxu0 0.0
    %242 = vmatpush1.msra.mxu0 0.0
    %243 = vmatprep.subr.mxu0 0.0
    %244 = vmatpush1.msra.mxu0 0.0
    %245 = vmatprep.subr.mxu0 0.0
    %246 = vmatpush1.msra.mxu0 0.0
    %247 = vmatprep.subr.mxu0 0.0
    %248 = vmatpush1.msra.mxu0 0.0
    %249 = vmatprep.subr.mxu0 0.0
    %250 = vmatpush1.msra.mxu0 0.0
    %251 = vmatprep.subr.mxu0 0.0
    %252 = vmatpush1.msra.mxu0 0.0
    %253 = vmatprep.subr.mxu0 0.0
    %254 = vmatpush1.msra.mxu0 0.0
    %255 = vmatprep.subr.mxu0 0.0
    %256 = vmatpush1.msra.mxu0 0.0
    %257 = vmatprep.subr.mxu0 0.0
    %258 = vmatpush1.msra.mxu0 0.0
    %259 = vmatprep.subr.mxu0 0.0
    %260 = vmatpush1.msra.mxu0 0.0
    %261 = vmatprep.subr.mxu0 0.0
    %262 = vmatpush1.msra.mxu0 0.0
    %263 = vmatprep.subr.mxu0 0.0
    %264 = vmatpush1.msra.mxu0 0.0
    %265 = vmatprep.subr.mxu0 0.0
    %266 = vmatpush1.msra.mxu0 0.0
    %267 = vmatprep.subr.mxu0 0.0
    %268 = vmatpush1.msra.mxu0 0.0
    %269 = vmatprep.subr.mxu0 0.0
    %270 = vmatpush1.msra.mxu0 0.0
    %271 = vmatprep.subr.mxu0 0.0
    %272 = vmatpush1.msra.mxu0 0.0
    %273 = vmatprep.subr.mxu0 0.0
    %274 = vmatpush1.msra.mxu0 0.0
    %275 = vmatprep.subr.mxu0 0.0
    %276 = vmatpush1.msra.mxu0 0.0
    %277 = vmatprep.subr.mxu0 0.0
    %278 = vmatpush1.msra.mxu0 0.0
    %279 = vmatprep.subr.mxu0 0.0
    %280 = vmatpush1.msra.mxu0 0.0
    %281 = vmatprep.subr.mxu0 0.0
    %282 = vmatpush1.msra.mxu0 0.0
    %283 = vmatprep.subr.mxu0 0.0
    %284 = vmatpush1.msra.mxu0 0.0
    %285 = vmatprep.subr.mxu0 0.0
    %286 = vmatpush1.msra.mxu0 0.0
    %287 = vmatprep.subr.mxu0 0.0
    %288 = vmatpush1.msra.mxu0 0.0
    %289 = vmatprep.subr.mxu0 0.0
    %290 = vmatpush1.msra.mxu0 0.0
    %291 = vmatprep.subr.mxu0 0.0
    %292 = vmatpush1.msra.mxu0 0.0
    %293 = vmatprep.subr.mxu0 0.0
    %294 = vmatpush1.msra.mxu0 0.0
    %295 = vmatprep.subr.mxu0 0.0
    %296 = vmatpush1.msra.mxu0 0.0
    %297 = vmatprep.mubr.f32.mxu0 0.0
    %298 = vmatmul.mubr.f32.gmra.mrb[0].mxu0 %v97
    %v299 = vpop.f32.mrb[0].mxu0
    %v300 = vadd.f32 %v86, %v299
    %v301 = vpop.f32.mrb[0].mxu0
    %v302 = vadd.f32 %v90, %v301
    %303 = vmatprep.mubr.f32.mxu0 0.0
    %304 = vmatmul.mubr.f32.gmra.mrb[0].mxu0 %v100
    %v305 = vpop.f32.mrb[0].mxu0
    %v306 = vadd.f32 %v86, %v305
    %v307 = vpop.f32.mrb[0].mxu0
    %v308 = vadd.f32 %v90, %v307
    %309 = vmatprep.mubr.f32.mxu0 0.0
    %310 = vmatmul.mubr.f32.gmra.mrb[0].mxu0 %v103
    %v311 = vpop.f32.mrb[0].mxu0
    %v312 = vadd.f32 %v86, %v311
    %v313 = vpop.f32.mrb[0].mxu0
    %v314 = vadd.f32 %v90, %v313
    %315 = vmatprep.mubr.f32.mxu0 0.0
    %316 = vmatmul.mubr.f32.gmra.mrb[0].mxu0 %v106
    %v317 = vpop.f32.mrb[0].mxu0
    %v318 = vadd.f32 %v86, %v317
    %v319 = vpop.f32.mrb[0].mxu0
    %v320 = vadd.f32 %v90, %v319
    %321 = vmatprep.mubr.f32.mxu0 0.0
    %322 = vmatmul.mubr.f32.gmra.mrb[0].mxu0 %v109
    %v323 = vpop.f32.mrb[0].mxu0
    %v324 = vadd.f32 %v86, %v323
    %v325 = vpop.f32.mrb[0].mxu0
    %v326 = vadd.f32 %v90, %v325
    %327 = vmatprep.mubr.f32.mxu0 0.0
    %328 = vmatmul.mubr.f32.gmra.mrb[0].mxu0 %v112
    %v329 = vpop.f32.mrb[0].mxu0
    %v330 = vadd.f32 %v86, %v329
    %v331 = vpop.f32.mrb[0].mxu0
    %v332 = vadd.f32 %v90, %v331
    %333 = vmatprep.mubr.f32.mxu0 0.0
    %334 = vmatmul.mubr.f32.gmra.mrb[0].mxu0 %v115
    %v335 = vpop.f32.mrb[0].mxu0
    %v336 = vadd.f32 %v86, %v335
    %v337 = vpop.f32.mrb[0].mxu0
    %v338 = vadd.f32 %v90, %v337
    %339 = vmatprep.mubr.f32.mxu0 0.0
    %340 = vmatmul.mubr.f32.gmra.mrb[0].mxu0 %v118
    %v341 = vpop.f32.mrb[0].mxu0
    %v342 = vadd.f32 %v86, %v341
    %v343 = vpop.f32.mrb[0].mxu0
    %v344 = vadd.f32 %v90, %v343
    %345 = vdwg.mxu0
    %346 = vst [vmem:[#allocation2] sm:$0xff] %v187
    %347 = vst [vmem:[#allocation2 + $0x8] sm:$0xff] %v189
    %348 = vst [vmem:[#allocation2 + $0x10] sm:$0xff] %v300
    %349 = vst [vmem:[#allocation2 + $0x18] sm:$0xff] %v302
    %350 = vst [vmem:[#allocation2 + $0x20] sm:$0xff] %v193
    %351 = vst [vmem:[#allocation2 + $0x28] sm:$0xff] %v195
    %352 = vst [vmem:[#allocation2 + $0x30] sm:$0xff] %v306
    %353 = vst [vmem:[#allocation2 + $0x38] sm:$0xff] %v308
    %354 = vst [vmem:[#allocation2 + $0x40] sm:$0xff] %v199
    %355 = vst [vmem:[#allocation2 + $0x48] sm:$0xff] %v201
    %356 = vst [vmem:[#allocation2 + $0x50] sm:$0xff] %v312
    %357 = vst [vmem:[#allocation2 + $0x58] sm:$0xff] %v314
    %358 = vst [vmem:[#allocation2 + $0x60] sm:$0xff] %v205
    %359 = vst [vmem:[#allocation2 + $0x68] sm:$0xff] %v207
    %360 = vst [vmem:[#allocation2 + $0x70] sm:$0xff] %v318
    %361 = vst [vmem:[#allocation2 + $0x78] sm:$0xff] %v320
    %362 = vst [vmem:[#allocation2 + $0x80] sm:$0xff] %v211
    %363 = vst [vmem:[#allocation2 + $0x88] sm:$0xff] %v213
    %364 = vst [vmem:[#allocation2 + $0x90] sm:$0xff] %v324
    %365 = vst [vmem:[#allocation2 + $0x98] sm:$0xff] %v326
    %366 = vst [vmem:[#allocation2 + $0xa0] sm:$0xff] %v217
    %367 = vst [vmem:[#allocation2 + $0xa8] sm:$0xff] %v219
    %368 = vst [vmem:[#allocation2 + $0xb0] sm:$0xff] %v330
    %369 = vst [vmem:[#allocation2 + $0xb8] sm:$0xff] %v332
    %370 = vst [vmem:[#allocation2 + $0xc0] sm:$0xff] %v223
    %371 = vst [vmem:[#allocation2 + $0xc8] sm:$0xff] %v225
    %372 = vst [vmem:[#allocation2 + $0xd0] sm:$0xff] %v336
    %373 = vst [vmem:[#allocation2 + $0xd8] sm:$0xff] %v338
    %374 = vst [vmem:[#allocation2 + $0xe0] sm:$0xff] %v229
    %375 = vst [vmem:[#allocation2 + $0xe8] sm:$0xff] %v231
    %376 = vst [vmem:[#allocation2 + $0xf0] sm:$0xff] %v342
    %377 = vst [vmem:[#allocation2 + $0xf8] sm:$0xff] %v344
    %378 = vrot.lane.b32.xlu0 %v57, 120
    %v379 = vpop.permute.xlu0 %378
    %380 = vrot.lane.b32.xlu0 %v58, 120
    %v381 = vpop.permute.xlu0 %380
    %382 = vrot.lane.b32.xlu0 %v59, 120
    %v383 = vpop.permute.xlu0 %382
    %384 = vrot.lane.b32.xlu0 %v60, 120
    %v385 = vpop.permute.xlu0 %384
    %386 = vrot.lane.b32.xlu0 %v61, 120
    %v387 = vpop.permute.xlu0 %386
    %388 = vrot.lane.b32.xlu0 %v62, 120
    %v389 = vpop.permute.xlu0 %388
    %390 = vrot.lane.b32.xlu0 %v63, 120
    %v391 = vpop.permute.xlu0 %390
    %392 = vrot.lane.b32.xlu0 %v64, 120
    %v393 = vpop.permute.xlu0 %392
    %vm402 = vcmask 64512
    %v403 = vsel %vm402, %v379, 0.0
    %404 = vadd.xlane.f32.xlu0 %v403
    %v405 = vpop.xlane.xlu0 %404
    %v406 = vsel %vm402, %v381, 0.0
    %407 = vadd.xlane.f32.xlu0 %v406
    %v408 = vpop.xlane.xlu0 %407
    %v409 = vsel %vm402, %v383, 0.0
    %410 = vadd.xlane.f32.xlu0 %v409
    %v411 = vpop.xlane.xlu0 %410
    %v412 = vsel %vm402, %v385, 0.0
    %413 = vadd.xlane.f32.xlu0 %v412
    %v414 = vpop.xlane.xlu0 %413
    %v415 = vsel %vm402, %v387, 0.0
    %416 = vadd.xlane.f32.xlu0 %v415
    %v417 = vpop.xlane.xlu0 %416
    %v418 = vsel %vm402, %v389, 0.0
    %419 = vadd.xlane.f32.xlu0 %v418
    %v420 = vpop.xlane.xlu0 %419
    %v421 = vsel %vm402, %v391, 0.0
    %422 = vadd.xlane.f32.xlu0 %v421
    %v423 = vpop.xlane.xlu0 %422
    %v424 = vsel %vm402, %v393, 0.0
    %425 = vadd.xlane.f32.xlu0 %v424
    %v426 = vpop.xlane.xlu0 %425
    %vm427 = vcmp.gt.f32.partialorder %v405, 0.0
    %vm428 = vcmp.gt.f32.partialorder %v408, 0.0
    %vm429 = vcmp.gt.f32.partialorder %v411, 0.0
    %vm430 = vcmp.gt.f32.partialorder %v414, 0.0
    %vm431 = vcmp.gt.f32.partialorder %v417, 0.0
    %vm432 = vcmp.gt.f32.partialorder %v420, 0.0
    %vm433 = vcmp.gt.f32.partialorder %v423, 0.0
    %vm434 = vcmp.gt.f32.partialorder %v426, 0.0
    %v435 = vsel %vm427, 1, 0
    %v436 = vsel %vm428, 1, 0
    %v437 = vsel %vm429, 1, 0
    %v438 = vsel %vm430, 1, 0
    %v439 = vsel %vm431, 1, 0
    %v440 = vsel %vm432, 1, 0
    %v441 = vsel %vm433, 1, 0
    %v442 = vsel %vm434, 1, 0
    %v443 = vcvt.s32.f32 %v435
    %v444 = vcvt.s32.f32 %v436
    %v445 = vcvt.s32.f32 %v437
    %v446 = vcvt.s32.f32 %v438
    %v447 = vcvt.s32.f32 %v439
    %v448 = vcvt.s32.f32 %v440
    %v449 = vcvt.s32.f32 %v441
    %v450 = vcvt.s32.f32 %v442
    %451 = vst [vmem:[#allocation3] sm:$0xff] %v443
    %452 = vst [vmem:[#allocation3 + $0x8] sm:$0xff] %v444
    %453 = vst [vmem:[#allocation3 + $0x10] sm:$0xff] %v445
    %454 = vst [vmem:[#allocation3 + $0x18] sm:$0xff] %v446
    %455 = vst [vmem:[#allocation3 + $0x20] sm:$0xff] %v447
    %456 = vst [vmem:[#allocation3 + $0x28] sm:$0xff] %v448
    %457 = vst [vmem:[#allocation3 + $0x30] sm:$0xff] %v449
    %458 = vst [vmem:[#allocation3 + $0x38] sm:$0xff] %v450
    %v459 = vld [vmem:[#allocation4] sm:$0xff]
    %v460 = vld [vmem:[#allocation4 + $0x8] sm:$0xff]
    %v461 = vld [vmem:[#allocation4 + $0x10] sm:$0xff]
    %v462 = vld [vmem:[#allocation4 + $0x18] sm:$0xff]
    %v463 = vld [vmem:[#allocation4 + $0x20] sm:$0xff]
    %v464 = vld [vmem:[#allocation4 + $0x28] sm:$0xff]
    %v465 = vld [vmem:[#allocation4 + $0x30] sm:$0xff]
    %v466 = vld [vmem:[#allocation4 + $0x38] sm:$0xff]
    %v467 = vld [vmem:[#allocation4 + $0x40] sm:$0xff]
    %v468 = vld [vmem:[#allocation4 + $0x48] sm:$0xff]
    %v469 = vld [vmem:[#allocation4 + $0x50] sm:$0xff]
    %v470 = vld [vmem:[#allocation4 + $0x58] sm:$0xff]
    %v471 = vld [vmem:[#allocation4 + $0x60] sm:$0xff]
    %v472 = vld [vmem:[#allocation4 + $0x68] sm:$0xff]
    %v473 = vld [vmem:[#allocation4 + $0x70] sm:$0xff]
    %v474 = vld [vmem:[#allocation4 + $0x78] sm:$0xff]
    %v475 = vld [vmem:[#allocation4 + $0x80] sm:$0xff]
    %v476 = vld [vmem:[#allocation4 + $0x88] sm:$0xff]
    %v477 = vld [vmem:[#allocation4 + $0x90] sm:$0xff]
    %v478 = vld [vmem:[#allocation4 + $0x98] sm:$0xff]
    %v479 = vld [vmem:[#allocation4 + $0xa0] sm:$0xff]
    %v480 = vld [vmem:[#allocation4 + $0xa8] sm:$0xff]
    %v481 = vld [vmem:[#allocation4 + $0xb0] sm:$0xff]
    %v482 = vld [vmem:[#allocation4 + $0xb8] sm:$0xff]
    %v483 = vld [vmem:[#allocation4 + $0xc0] sm:$0xff]
    %v484 = vld [vmem:[#allocation4 + $0xc8] sm:$0xff]
    %v485 = vld [vmem:[#allocation4 + $0xd0] sm:$0xff]
    %v486 = vld [vmem:[#allocation4 + $0xd8] sm:$0xff]
    %v487 = vld [vmem:[#allocation4 + $0xe0] sm:$0xff]
    %v488 = vld [vmem:[#allocation4 + $0xe8] sm:$0xff]
    %v489 = vld [vmem:[#allocation4 + $0xf0] sm:$0xff]
    %v490 = vld [vmem:[#allocation4 + $0xf8] sm:$0xff]
    %v491 = vld [vmem:[#allocation4 + $0x100] sm:$0xff]
    %v492 = vld [vmem:[#allocation4 + $0x108] sm:$0xff]
    %v493 = vld [vmem:[#allocation4 + $0x110] sm:$0xff]
    %v494 = vld [vmem:[#allocation4 + $0x118] sm:$0xff]
    %v495 = vld [vmem:[#allocation4 + $0x120] sm:$0xff]
    %v496 = vld [vmem:[#allocation4 + $0x128] sm:$0xff]
    %v497 = vld [vmem:[#allocation4 + $0x130] sm:$0xff]
    %v498 = vld [vmem:[#allocation4 + $0x138] sm:$0xff]
    %v499 = vld [vmem:[#allocation4 + $0x140] sm:$0xff]
    %v500 = vld [vmem:[#allocation4 + $0x148] sm:$0xff]
    %v501 = vld [vmem:[#allocation4 + $0x150] sm:$0xff]
    %v502 = vld [vmem:[#allocation4 + $0x158] sm:$0xff]
    %v503 = vld [vmem:[#allocation4 + $0x160] sm:$0xff]
    %v504 = vld [vmem:[#allocation4 + $0x168] sm:$0xff]
    %v505 = vld [vmem:[#allocation4 + $0x170] sm:$0xff]
    %v506 = vld [vmem:[#allocation4 + $0x178] sm:$0xff]
    %v507 = vld [vmem:[#allocation4 + $0x180] sm:$0xff]
    %v508 = vld [vmem:[#allocation4 + $0x188] sm:$0xff]
    %v509 = vld [vmem:[#allocation4 + $0x190] sm:$0xff]
    %v510 = vld [vmem:[#allocation4 + $0x198] sm:$0xff]
    %v511 = vld [vmem:[#allocation4 + $0x1a0] sm:$0xff]
    %v512 = vld [vmem:[#allocation4 + $0x1a8] sm:$0xff]
    %v513 = vld [vmem:[#allocation4 + $0x1b0] sm:$0xff]
    %v514 = vld [vmem:[#allocation4 + $0x1b8] sm:$0xff]
    %v515 = vld [vmem:[#allocation4 + $0x1c0] sm:$0xff]
    %v516 = vld [vmem:[#allocation4 + $0x1c8] sm:$0xff]
    %v517 = vld [vmem:[#allocation4 + $0x1d0] sm:$0xff]
    %v518 = vld [vmem:[#allocation4 + $0x1d8] sm:$0xff]
    %v519 = vld [vmem:[#allocation4 + $0x1e0] sm:$0xff]
    %v520 = vld [vmem:[#allocation4 + $0x1e8] sm:$0xff]
    %v521 = vld [vmem:[#allocation4 + $0x1f0] sm:$0xff]
    %v522 = vld [vmem:[#allocation4 + $0x1f8] sm:$0xff]
    %s523 = smul.u32 0, 4
    %s524 = smul.addr %s523, 8
    %s525 = scalar_lea.vmem [#allocation2], %s524
    %v526 = vld [vmem:[%s525] sm:$0xff]
    %v527 = vld [vmem:[%s525 + $0x8] sm:$0xff]
    %v528 = vld [vmem:[%s525 + $0x10] sm:$0xff]
    %v529 = vld [vmem:[%s525 + $0x18] sm:$0xff]
    %530 = vmatprep.subr.mxu0 %v460
    %531 = vmatpush1.msra.mxu0 %v459
    %532 = vmatprep.subr.mxu0 %v464
    %533 = vmatpush1.msra.mxu0 %v463
    %534 = vmatprep.subr.mxu0 %v468
    %535 = vmatpush1.msra.mxu0 %v467
    %536 = vmatprep.subr.mxu0 %v472
    %537 = vmatpush1.msra.mxu0 %v471
    %538 = vmatprep.subr.mxu0 %v476
    %539 = vmatpush1.msra.mxu0 %v475
    %540 = vmatprep.subr.mxu0 %v480
    %541 = vmatpush1.msra.mxu0 %v479
    %542 = vmatprep.subr.mxu0 %v484
    %543 = vmatpush1.msra.mxu0 %v483
    %544 = vmatprep.subr.mxu0 %v488
    %545 = vmatpush1.msra.mxu0 %v487
    %546 = vmatprep.subr.mxu0 %v492
    %547 = vmatpush1.msra.mxu0 %v491
    %548 = vmatprep.subr.mxu0 %v496
    %549 = vmatpush1.msra.mxu0 %v495
    %550 = vmatprep.subr.mxu0 %v500
    %551 = vmatpush1.msra.mxu0 %v499
    %552 = vmatprep.subr.mxu0 %v504
    %553 = vmatpush1.msra.mxu0 %v503
    %554 = vmatprep.subr.mxu0 %v508
    %555 = vmatpush1.msra.mxu0 %v507
    %556 = vmatprep.subr.mxu0 %v512
    %557 = vmatpush1.msra.mxu0 %v511
    %558 = vmatprep.subr.mxu0 %v516
    %559 = vmatpush1.msra.mxu0 %v515
    %560 = vmatprep.subr.mxu0 %v520
    %561 = vmatpush1.msra.mxu0 %v519
    %562 = vmatprep.subr.mxu0 0.0
    %563 = vmatpush1.msra.mxu0 0.0
    %564 = vmatprep.subr.mxu0 0.0
    %565 = vmatpush1.msra.mxu0 0.0
    %566 = vmatprep.subr.mxu0 0.0
    %567 = vmatpush1.msra.mxu0 0.0
    %568 = vmatprep.subr.mxu0 0.0
    %569 = vmatpush1.msra.mxu0 0.0
    %570 = vmatprep.subr.mxu0 0.0
    %571 = vmatpush1.msra.mxu0 0.0
    %572 = vmatprep.subr.mxu0 0.0
    %573 = vmatpush1.msra.mxu0 0.0
    %574 = vmatprep.subr.mxu0 0.0
    %575 = vmatpush1.msra.mxu0 0.0
    %576 = vmatprep.subr.mxu0 0.0
    %577 = vmatpush1.msra.mxu0 0.0
    %578 = vmatprep.subr.mxu0 0.0
    %579 = vmatpush1.msra.mxu0 0.0
    %580 = vmatprep.subr.mxu0 0.0
    %581 = vmatpush1.msra.mxu0 0.0
    %582 = vmatprep.subr.mxu0 0.0
    %583 = vmatpush1.msra.mxu0 0.0
    %584 = vmatprep.subr.mxu0 0.0
    %585 = vmatpush1.msra.mxu0 0.0
    %586 = vmatprep.subr.mxu0 0.0
    %587 = vmatpush1.msra.mxu0 0.0
    %588 = vmatprep.subr.mxu0 0.0
    %589 = vmatpush1.msra.mxu0 0.0
    %590 = vmatprep.subr.mxu0 0.0
    %591 = vmatpush1.msra.mxu0 0.0
    %592 = vmatprep.subr.mxu0 0.0
    %593 = vmatpush1.msra.mxu0 0.0
    %594 = vmatprep.mubr.f32.mxu0 0.0
    %595 = vmatmul.mubr.f32.gmra.mrb[0].mxu0 0.0
    %v596 = vpop.f32.mrb[0].mxu0
    %v597 = vadd.f32 0.0, %v596
    %v598 = vpop.f32.mrb[0].mxu0
    %v599 = vadd.f32 0.0, %v598
    %600 = vdwg.mxu0
    %601 = vmatprep.subr.mxu0 %v462
    %602 = vmatpush1.msra.mxu0 %v461
    %603 = vmatprep.subr.mxu0 %v466
    %604 = vmatpush1.msra.mxu0 %v465
    %605 = vmatprep.subr.mxu0 %v470
    %606 = vmatpush1.msra.mxu0 %v469
    %607 = vmatprep.subr.mxu0 %v474
    %608 = vmatpush1.msra.mxu0 %v473
    %609 = vmatprep.subr.mxu0 %v478
    %610 = vmatpush1.msra.mxu0 %v477
    %611 = vmatprep.subr.mxu0 %v482
    %612 = vmatpush1.msra.mxu0 %v481
    %613 = vmatprep.subr.mxu0 %v486
    %614 = vmatpush1.msra.mxu0 %v485
    %615 = vmatprep.subr.mxu0 %v490
    %616 = vmatpush1.msra.mxu0 %v489
    %617 = vmatprep.subr.mxu0 %v494
    %618 = vmatpush1.msra.mxu0 %v493
    %619 = vmatprep.subr.mxu0 %v498
    %620 = vmatpush1.msra.mxu0 %v497
    %621 = vmatprep.subr.mxu0 %v502
    %622 = vmatpush1.msra.mxu0 %v501
    %623 = vmatprep.subr.mxu0 %v506
    %624 = vmatpush1.msra.mxu0 %v505
    %625 = vmatprep.subr.mxu0 %v510
    %626 = vmatpush1.msra.mxu0 %v509
    %627 = vmatprep.subr.mxu0 %v514
    %628 = vmatpush1.msra.mxu0 %v513
    %629 = vmatprep.subr.mxu0 %v518
    %630 = vmatpush1.msra.mxu0 %v517
    %631 = vmatprep.subr.mxu0 %v522
    %632 = vmatpush1.msra.mxu0 %v521
    %633 = vmatprep.subr.mxu0 0.0
    %634 = vmatpush1.msra.mxu0 0.0
    %635 = vmatprep.subr.mxu0 0.0
    %636 = vmatpush1.msra.mxu0 0.0
    %637 = vmatprep.subr.mxu0 0.0
    %638 = vmatpush1.msra.mxu0 0.0
    %639 = vmatprep.subr.mxu0 0.0
    %640 = vmatpush1.msra.mxu0 0.0
    %641 = vmatprep.subr.mxu0 0.0
    %642 = vmatpush1.msra.mxu0 0.0
    %643 = vmatprep.subr.mxu0 0.0
    %644 = vmatpush1.msra.mxu0 0.0
    %645 = vmatprep.subr.mxu0 0.0
    %646 = vmatpush1.msra.mxu0 0.0
    %647 = vmatprep.subr.mxu0 0.0
    %648 = vmatpush1.msra.mxu0 0.0
    %649 = vmatprep.subr.mxu0 0.0
    %650 = vmatpush1.msra.mxu0 0.0
    %651 = vmatprep.subr.mxu0 0.0
    %652 = vmatpush1.msra.mxu0 0.0
    %653 = vmatprep.subr.mxu0 0.0
    %654 = vmatpush1.msra.mxu0 0.0
    %655 = vmatprep.subr.mxu0 0.0
    %656 = vmatpush1.msra.mxu0 0.0
    %657 = vmatprep.subr.mxu0 0.0
    %658 = vmatpush1.msra.mxu0 0.0
    %659 = vmatprep.subr.mxu0 0.0
    %660 = vmatpush1.msra.mxu0 0.0
    %661 = vmatprep.subr.mxu0 0.0
    %662 = vmatpush1.msra.mxu0 0.0
    %663 = vmatprep.subr.mxu0 0.0
    %664 = vmatpush1.msra.mxu0 0.0
    %665 = vmatprep.mubr.f32.mxu0 0.0
    %666 = vmatmul.mubr.f32.gmra.mrb[0].mxu0 0.0
    %v667 = vpop.f32.mrb[0].mxu0
    %v668 = vadd.f32 0.0, %v667
    %v669 = vpop.f32.mrb[0].mxu0
    %v670 = vadd.f32 0.0, %v669
    %671 = vdwg.mxu0
    %v672 = vadd.f32 %v526, %v597
    %v673 = vadd.f32 %v527, %v599
    %v674 = vadd.f32 %v528, %v668
    %v675 = vadd.f32 %v529, %v670
    %v676 = vxor.u32 %v672, 2147483648
    %v677 = vmul.f32 %v676, 1.442695
    %v678 = vpow.pop %v677
    %v679 = vadd.f32 %v678, 1.0
    %v680 = vrcp.pop %v679
    %v681 = vmul.f32 1.0, %v680
    %v682 = vxor.u32 %v673, 2147483648
    %v683 = vmul.f32 %v682, 1.442695
    %v684 = vpow.pop %v683
    %v685 = vadd.f32 %v684, 1.0
    %v686 = vrcp.pop %v685
    %v687 = vmul.f32 1.0, %v686
    %v688 = vtanh.pop %v674
    %v689 = vxor.u32 %v675, 2147483648
    %v690 = vmul.f32 %v689, 1.442695
    %v691 = vpow.pop %v690
    %v692 = vadd.f32 %v691, 1.0
    %v693 = vrcp.pop %v692
    %v694 = vmul.f32 1.0, %v693
    %v695 = vmul.f32 %v687, 0.0
    %v696 = vmul.f32 %v681, %v688
    %v697 = vadd.f32 %v695, %v696
    %v698 = vtanh.pop %v697
    %v699 = vmul.f32 %v694, %v698
    %v700 = vld [vmem:[#allocation3] sm:$0xff]
    %v701 = vmul.f32 %v700, %v699
    %v702 = vsub.f32 1.0, %v700
    %v703 = vmul.f32 %v702, 0.0
    %v704 = vadd.f32 %v701, %v703
    %v705 = vmul.f32 %v700, %v697
    %v706 = vadd.f32 %v705, %v703
    %s707 = smul.u32 1, 4
    %s708 = smul.addr %s707, 8
    %s709 = scalar_lea.vmem [#allocation2], %s708
    %v710 = vld [vmem:[%s709] sm:$0xff]
    %v711 = vld [vmem:[%s709 + $0x8] sm:$0xff]
    %v712 = vld [vmem:[%s709 + $0x10] sm:$0xff]
    %v713 = vld [vmem:[%s709 + $0x18] sm:$0xff]
    %714 = vmatprep.subr.mxu0 %v460
    %715 = vmatpush1.msra.mxu0 %v459
    %716 = vmatprep.subr.mxu0 %v464
    %717 = vmatpush1.msra.mxu0 %v463
    %718 = vmatprep.subr.mxu0 %v468
    %719 = vmatpush1.msra.mxu0 %v467
    %720 = vmatprep.subr.mxu0 %v472
    %721 = vmatpush1.msra.mxu0 %v471
    %722 = vmatprep.subr.mxu0 %v476
    %723 = vmatpush1.msra.mxu0 %v475
    %724 = vmatprep.subr.mxu0 %v480
    %725 = vmatpush1.msra.mxu0 %v479
    %726 = vmatprep.subr.mxu0 %v484
    %727 = vmatpush1.msra.mxu0 %v483
    %728 = vmatprep.subr.mxu0 %v488
    %729 = vmatpush1.msra.mxu0 %v487
    %730 = vmatprep.subr.mxu0 %v492
    %731 = vmatpush1.msra.mxu0 %v491
    %732 = vmatprep.subr.mxu0 %v496
    %733 = vmatpush1.msra.mxu0 %v495
    %734 = vmatprep.subr.mxu0 %v500
    %735 = vmatpush1.msra.mxu0 %v499
    %736 = vmatprep.subr.mxu0 %v504
    %737 = vmatpush1.msra.mxu0 %v503
    %738 = vmatprep.subr.mxu0 %v508
    %739 = vmatpush1.msra.mxu0 %v507
    %740 = vmatprep.subr.mxu0 %v512
    %741 = vmatpush1.msra.mxu0 %v511
    %742 = vmatprep.subr.mxu0 %v516
    %743 = vmatpush1.msra.mxu0 %v515
    %744 = vmatprep.subr.mxu0 %v520
    %745 = vmatpush1.msra.mxu0 %v519
    %746 = vmatprep.subr.mxu0 0.0
    %747 = vmatpush1.msra.mxu0 0.0
    %748 = vmatprep.subr.mxu0 0.0
    %749 = vmatpush1.msra.mxu0 0.0
    %750 = vmatprep.subr.mxu0 0.0
    %751 = vmatpush1.msra.mxu0 0.0
    %752 = vmatprep.subr.mxu0 0.0
    %753 = vmatpush1.msra.mxu0 0.0
    %754 = vmatprep.subr.mxu0 0.0
    %755 = vmatpush1.msra.mxu0 0.0
    %756 = vmatprep.subr.mxu0 0.0
    %757 = vmatpush1.msra.mxu0 0.0
    %758 = vmatprep.subr.mxu0 0.0
    %759 = vmatpush1.msra.mxu0 0.0
    %760 = vmatprep.subr.mxu0 0.0
    %761 = vmatpush1.msra.mxu0 0.0
    %762 = vmatprep.subr.mxu0 0.0
    %763 = vmatpush1.msra.mxu0 0.0
    %764 = vmatprep.subr.mxu0 0.0
    %765 = vmatpush1.msra.mxu0 0.0
    %766 = vmatprep.subr.mxu0 0.0
    %767 = vmatpush1.msra.mxu0 0.0
    %768 = vmatprep.subr.mxu0 0.0
    %769 = vmatpush1.msra.mxu0 0.0
    %770 = vmatprep.subr.mxu0 0.0
    %771 = vmatpush1.msra.mxu0 0.0
    %772 = vmatprep.subr.mxu0 0.0
    %773 = vmatpush1.msra.mxu0 0.0
    %774 = vmatprep.subr.mxu0 0.0
    %775 = vmatpush1.msra.mxu0 0.0
    %776 = vmatprep.subr.mxu0 0.0
    %777 = vmatpush1.msra.mxu0 0.0
    %778 = vmatprep.mubr.f32.mxu0 0.0
    %779 = vmatmul.mubr.f32.gmra.mrb[0].mxu0 %v704
    %v780 = vpop.f32.mrb[0].mxu0
    %v781 = vadd.f32 0.0, %v780
    %v782 = vpop.f32.mrb[0].mxu0
    %v783 = vadd.f32 0.0, %v782
    %784 = vdwg.mxu0
    %785 = vmatprep.subr.mxu0 %v462
    %786 = vmatpush1.msra.mxu0 %v461
    %787 = vmatprep.subr.mxu0 %v466
    %788 = vmatpush1.msra.mxu0 %v465
    %789 = vmatprep.subr.mxu0 %v470
    %790 = vmatpush1.msra.mxu0 %v469
    %791 = vmatprep.subr.mxu0 %v474
    %792 = vmatpush1.msra.mxu0 %v473
    %793 = vmatprep.subr.mxu0 %v478
    %794 = vmatpush1.msra.mxu0 %v477
    %795 = vmatprep.subr.mxu0 %v482
    %796 = vmatpush1.msra.mxu0 %v481
    %797 = vmatprep.subr.mxu0 %v486
    %798 = vmatpush1.msra.mxu0 %v485
    %799 = vmatprep.subr.mxu0 %v490
    %800 = vmatpush1.msra.mxu0 %v489
    %801 = vmatprep.subr.mxu0 %v494
    %802 = vmatpush1.msra.mxu0 %v493
    %803 = vmatprep.subr.mxu0 %v498
    %804 = vmatpush1.msra.mxu0 %v497
    %805 = vmatprep.subr.mxu0 %v502
    %806 = vmatpush1.msra.mxu0 %v501
    %807 = vmatprep.subr.mxu0 %v506
    %808 = vmatpush1.msra.mxu0 %v505
    %809 = vmatprep.subr.mxu0 %v510
    %810 = vmatpush1.msra.mxu0 %v509
    %811 = vmatprep.subr.mxu0 %v514
    %812 = vmatpush1.msra.mxu0 %v513
    %813 = vmatprep.subr.mxu0 %v518
    %814 = vmatpush1.msra.mxu0 %v517
    %815 = vmatprep.subr.mxu0 %v522
    %816 = vmatpush1.msra.mxu0 %v521
    %817 = vmatprep.subr.mxu0 0.0
    %818 = vmatpush1.msra.mxu0 0.0
    %819 = vmatprep.subr.mxu0 0.0
    %820 = vmatpush1.msra.mxu0 0.0
    %821 = vmatprep.subr.mxu0 0.0
    %822 = vmatpush1.msra.mxu0 0.0
    %823 = vmatprep.subr.mxu0 0.0
    %824 = vmatpush1.msra.mxu0 0.0
    %825 = vmatprep.subr.mxu0 0.0
    %826 = vmatpush1.msra.mxu0 0.0
    %827 = vmatprep.subr.mxu0 0.0
    %828 = vmatpush1.msra.mxu0 0.0
    %829 = vmatprep.subr.mxu0 0.0
    %830 = vmatpush1.msra.mxu0 0.0
    %831 = vmatprep.subr.mxu0 0.0
    %832 = vmatpush1.msra.mxu0 0.0
    %833 = vmatprep.subr.mxu0 0.0
    %834 = vmatpush1.msra.mxu0 0.0
    %835 = vmatprep.subr.mxu0 0.0
    %836 = vmatpush1.msra.mxu0 0.0
    %837 = vmatprep.subr.mxu0 0.0
    %838 = vmatpush1.msra.mxu0 0.0
    %839 = vmatprep.subr.mxu0 0.0
    %840 = vmatpush1.msra.mxu0 0.0
    %841 = vmatprep.subr.mxu0 0.0
    %842 = vmatpush1.msra.mxu0 0.0
    %843 = vmatprep.subr.mxu0 0.0
    %844 = vmatpush1.msra.mxu0 0.0
    %845 = vmatprep.subr.mxu0 0.0
    %846 = vmatpush1.msra.mxu0 0.0
    %847 = vmatprep.subr.mxu0 0.0
    %848 = vmatpush1.msra.mxu0 0.0
    %849 = vmatprep.mubr.f32.mxu0 0.0
    %850 = vmatmul.mubr.f32.gmra.mrb[0].mxu0 %v704
    %v851 = vpop.f32.mrb[0].mxu0
    %v852 = vadd.f32 0.0, %v851
    %v853 = vpop.f32.mrb[0].mxu0
    %v854 = vadd.f32 0.0, %v853
    %855 = vdwg.mxu0
    %v856 = vadd.f32 %v710, %v781
    %v857 = vadd.f32 %v711, %v783
    %v858 = vadd.f32 %v712, %v852
    %v859 = vadd.f32 %v713, %v854
    %v860 = vxor.u32 %v856, 2147483648
    %v861 = vmul.f32 %v860, 1.442695
    %v862 = vpow.pop %v861
    %v863 = vadd.f32 %v862, 1.0
    %v864 = vrcp.pop %v863
    %v865 = vmul.f32 1.0, %v864
    %v866 = vxor.u32 %v857, 2147483648
    %v867 = vmul.f32 %v866, 1.442695
    %v868 = vpow.pop %v867
    %v869 = vadd.f32 %v868, 1.0
    %v870 = vrcp.pop %v869
    %v871 = vmul.f32 1.0, %v870
    %v872 = vtanh.pop %v858
    %v873 = vxor.u32 %v859, 2147483648
    %v874 = vmul.f32 %v873, 1.442695
    %v875 = vpow.pop %v874
    %v876 = vadd.f32 %v875, 1.0
    %v877 = vrcp.pop %v876
    %v878 = vmul.f32 1.0, %v877
    %v879 = vmul.f32 %v871, %v706
    %v880 = vmul.f32 %v865, %v872
    %v881 = vadd.f32 %v879, %v880
    %v882 = vtanh.pop %v881
    %v883 = vmul.f32 %v878, %v882
    %s884 = scalar_lea.vmem [#allocation3], 8
    %v885 = vld [vmem:[%s884] sm:$0xff]
    %v886 = vmul.f32 %v885, %v883
    %v887 = vsub.f32 1.0, %v885
    %v888 = vmul.f32 %v887, %v704
    %v889 = vadd.f32 %v886, %v888
    %v890 = vmul.f32 %v885, %v881
    %v891 = vmul.f32 %v887, %v706
    %v892 = vadd.f32 %v890, %v891
    %s893 = smul.u32 2, 4
    %s894 = smul.addr %s893, 8
    %s895 = scalar_lea.vmem [#allocation2], %s894
    %v896 = vld [vmem:[%s895] sm:$0xff]
    %v897 = vld [vmem:[%s895 + $0x8] sm:$0xff]
    %v898 = vld [vmem:[%s895 + $0x10] sm:$0xff]
    %v899 = vld [vmem:[%s895 + $0x18] sm:$0xff]
    %900 = vmatprep.subr.mxu0 %v460
    %901 = vmatpush1.msra.mxu0 %v459
    %902 = vmatprep.subr.mxu0 %v464
    %903 = vmatpush1.msra.mxu0 %v463
    %904 = vmatprep.subr.mxu0 %v468
    %905 = vmatpush1.msra.mxu0 %v467
    %906 = vmatprep.subr.mxu0 %v472
    %907 = vmatpush1.msra.mxu0 %v471
    %908 = vmatprep.subr.mxu0 %v476
    %909 = vmatpush1.msra.mxu0 %v475
    %910 = vmatprep.subr.mxu0 %v480
    %911 = vmatpush1.msra.mxu0 %v479
    %912 = vmatprep.subr.mxu0 %v484
    %913 = vmatpush1.msra.mxu0 %v483
    %914 = vmatprep.subr.mxu0 %v488
    %915 = vmatpush1.msra.mxu0 %v487
    %916 = vmatprep.subr.mxu0 %v492
    %917 = vmatpush1.msra.mxu0 %v491
    %918 = vmatprep.subr.mxu0 %v496
    %919 = vmatpush1.msra.mxu0 %v495
    %920 = vmatprep.subr.mxu0 %v500
    %921 = vmatpush1.msra.mxu0 %v499
    %922 = vmatprep.subr.mxu0 %v504
    %923 = vmatpush1.msra.mxu0 %v503
    %924 = vmatprep.subr.mxu0 %v508
    %925 = vmatpush1.msra.mxu0 %v507
    %926 = vmatprep.subr.mxu0 %v512
    %927 = vmatpush1.msra.mxu0 %v511
    %928 = vmatprep.subr.mxu0 %v516
    %929 = vmatpush1.msra.mxu0 %v515
    %930 = vmatprep.subr.mxu0 %v520
    %931 = vmatpush1.msra.mxu0 %v519
    %932 = vmatprep.subr.mxu0 0.0
    %933 = vmatpush1.msra.mxu0 0.0
    %934 = vmatprep.subr.mxu0 0.0
    %935 = vmatpush1.msra.mxu0 0.0
    %936 = vmatprep.subr.mxu0 0.0
    %937 = vmatpush1.msra.mxu0 0.0
    %938 = vmatprep.subr.mxu0 0.0
    %939 = vmatpush1.msra.mxu0 0.0
    %940 = vmatprep.subr.mxu0 0.0
    %941 = vmatpush1.msra.mxu0 0.0
    %942 = vmatprep.subr.mxu0 0.0
    %943 = vmatpush1.msra.mxu0 0.0
    %944 = vmatprep.subr.mxu0 0.0
    %945 = vmatpush1.msra.mxu0 0.0
    %946 = vmatprep.subr.mxu0 0.0
    %947 = vmatpush1.msra.mxu0 0.0
    %948 = vmatprep.subr.mxu0 0.0
    %949 = vmatpush1.msra.mxu0 0.0
    %950 = vmatprep.subr.mxu0 0.0
    %951 = vmatpush1.msra.mxu0 0.0
    %952 = vmatprep.subr.mxu0 0.0
    %953 = vmatpush1.msra.mxu0 0.0
    %954 = vmatprep.subr.mxu0 0.0
    %955 = vmatpush1.msra.mxu0 0.0
    %956 = vmatprep.subr.mxu0 0.0
    %957 = vmatpush1.msra.mxu0 0.0
    %958 = vmatprep.subr.mxu0 0.0
    %959 = vmatpush1.msra.mxu0 0.0
    %960 = vmatprep.subr.mxu0 0.0
    %961 = vmatpush1.msra.mxu0 0.0
    %962 = vmatprep.subr.mxu0 0.0
    %963 = vmatpush1.msra.mxu0 0.0
    %964 = vmatprep.mubr.f32.mxu0 0.0
    %965 = vmatmul.mubr.f32.gmra.mrb[0].mxu0 %v889
    %v966 = vpop.f32.mrb[0].mxu0
    %v967 = vadd.f32 0.0, %v966
    %v968 = vpop.f32.mrb[0].mxu0
    %v969 = vadd.f32 0.0, %v968
    %970 = vdwg.mxu0
    %971 = vmatprep.subr.mxu0 %v462
    %972 = vmatpush1.msra.mxu0 %v461
    %973 = vmatprep.subr.mxu0 %v466
    %974 = vmatpush1.msra.mxu0 %v465
    %975 = vmatprep.subr.mxu0 %v470
    %976 = vmatpush1.msra.mxu0 %v469
    %977 = vmatprep.subr.mxu0 %v474
    %978 = vmatpush1.msra.mxu0 %v473
    %979 = vmatprep.subr.mxu0 %v478
    %980 = vmatpush1.msra.mxu0 %v477
    %981 = vmatprep.subr.mxu0 %v482
    %982 = vmatpush1.msra.mxu0 %v481
    %983 = vmatprep.subr.mxu0 %v486
    %984 = vmatpush1.msra.mxu0 %v485
    %985 = vmatprep.subr.mxu0 %v490
    %986 = vmatpush1.msra.mxu0 %v489
    %987 = vmatprep.subr.mxu0 %v494
    %988 = vmatpush1.msra.mxu0 %v493
    %989 = vmatprep.subr.mxu0 %v498
    %990 = vmatpush1.msra.mxu0 %v497
    %991 = vmatprep.subr.mxu0 %v502
    %992 = vmatpush1.msra.mxu0 %v501
    %993 = vmatprep.subr.mxu0 %v506
    %994 = vmatpush1.msra.mxu0 %v505
    %995 = vmatprep.subr.mxu0 %v510
    %996 = vmatpush1.msra.mxu0 %v509
    %997 = vmatprep.subr.mxu0 %v514
    %998 = vmatpush1.msra.mxu0 %v513
    %999 = vmatprep.subr.mxu0 %v518
    %1000 = vmatpush1.msra.mxu0 %v517
    %1001 = vmatprep.subr.mxu0 %v522
    %1002 = vmatpush1.msra.mxu0 %v521
    %1003 = vmatprep.subr.mxu0 0.0
    %1004 = vmatpush1.msra.mxu0 0.0
    %1005 = vmatprep.subr.mxu0 0.0
    %1006 = vmatpush1.msra.mxu0 0.0
    %1007 = vmatprep.subr.mxu0 0.0
    %1008 = vmatpush1.msra.mxu0 0.0
    %1009 = vmatprep.subr.mxu0 0.0
    %1010 = vmatpush1.msra.mxu0 0.0
    %1011 = vmatprep.subr.mxu0 0.0
    %1012 = vmatpush1.msra.mxu0 0.0
    %1013 = vmatprep.subr.mxu0 0.0
    %1014 = vmatpush1.msra.mxu0 0.0
    %1015 = vmatprep.subr.mxu0 0.0
    %1016 = vmatpush1.msra.mxu0 0.0
    %1017 = vmatprep.subr.mxu0 0.0
    %1018 = vmatpush1.msra.mxu0 0.0
    %1019 = vmatprep.subr.mxu0 0.0
    %1020 = vmatpush1.msra.mxu0 0.0
    %1021 = vmatprep.subr.mxu0 0.0
    %1022 = vmatpush1.msra.mxu0 0.0
    %1023 = vmatprep.subr.mxu0 0.0
    %1024 = vmatpush1.msra.mxu0 0.0
    %1025 = vmatprep.subr.mxu0 0.0
    %1026 = vmatpush1.msra.mxu0 0.0
    %1027 = vmatprep.subr.mxu0 0.0
    %1028 = vmatpush1.msra.mxu0 0.0
    %1029 = vmatprep.subr.mxu0 0.0
    %1030 = vmatpush1.msra.mxu0 0.0
    %1031 = vmatprep.subr.mxu0 0.0
    %1032 = vmatpush1.msra.mxu0 0.0
    %1033 = vmatprep.subr.mxu0 0.0
    %1034 = vmatpush1.msra.mxu0 0.0
    %1035 = vmatprep.mubr.f32.mxu0 0.0
    %1036 = vmatmul.mubr.f32.gmra.mrb[0].mxu0 %v889
    %v1037 = vpop.f32.mrb[0].mxu0
    %v1038 = vadd.f32 0.0, %v1037
    %v1039 = vpop.f32.mrb[0].mxu0
    %v1040 = vadd.f32 0.0, %v1039
    %1041 = vdwg.mxu0
    %v1042 = vadd.f32 %v896, %v967
    %v1043 = vadd.f32 %v897, %v969
    %v1044 = vadd.f32 %v898, %v1038
    %v1045 = vadd.f32 %v899, %v1040
    %v1046 = vxor.u32 %v1042, 2147483648
    %v1047 = vmul.f32 %v1046, 1.442695
    %v1048 = vpow.pop %v1047
    %v1049 = vadd.f32 %v1048, 1.0
    %v1050 = vrcp.pop %v1049
    %v1051 = vmul.f32 1.0, %v1050
    %v1052 = vxor.u32 %v1043, 2147483648
    %v1053 = vmul.f32 %v1052, 1.442695
    %v1054 = vpow.pop %v1053
    %v1055 = vadd.f32 %v1054, 1.0
    %v1056 = vrcp.pop %v1055
    %v1057 = vmul.f32 1.0, %v1056
    %v1058 = vtanh.pop %v1044
    %v1059 = vxor.u32 %v1045, 2147483648
    %v1060 = vmul.f32 %v1059, 1.442695
    %v1061 = vpow.pop %v1060
    %v1062 = vadd.f32 %v1061, 1.0
    %v1063 = vrcp.pop %v1062
    %v1064 = vmul.f32 1.0, %v1063
    %v1065 = vmul.f32 %v1057, %v892
    %v1066 = vmul.f32 %v1051, %v1058
    %v1067 = vadd.f32 %v1065, %v1066
    %v1068 = vtanh.pop %v1067
    %v1069 = vmul.f32 %v1064, %v1068
    %s1070 = scalar_lea.vmem [#allocation3], 16
    %v1071 = vld [vmem:[%s1070] sm:$0xff]
    %v1072 = vmul.f32 %v1071, %v1069
    %v1073 = vsub.f32 1.0, %v1071
    %v1074 = vmul.f32 %v1073, %v889
    %v1075 = vadd.f32 %v1072, %v1074
    %v1076 = vmul.f32 %v1071, %v1067
    %v1077 = vmul.f32 %v1073, %v892
    %v1078 = vadd.f32 %v1076, %v1077
    %s1079 = smul.u32 3, 4
    %s1080 = smul.addr %s1079, 8
    %s1081 = scalar_lea.vmem [#allocation2], %s1080
    %v1082 = vld [vmem:[%s1081] sm:$0xff]
    %v1083 = vld [vmem:[%s1081 + $0x8] sm:$0xff]
    %v1084 = vld [vmem:[%s1081 + $0x10] sm:$0xff]
    %v1085 = vld [vmem:[%s1081 + $0x18] sm:$0xff]
    %1086 = vmatprep.subr.mxu0 %v460
    %1087 = vmatpush1.msra.mxu0 %v459
    %1088 = vmatprep.subr.mxu0 %v464
    %1089 = vmatpush1.msra.mxu0 %v463
    %1090 = vmatprep.subr.mxu0 %v468
    %1091 = vmatpush1.msra.mxu0 %v467
    %1092 = vmatprep.subr.mxu0 %v472
    %1093 = vmatpush1.msra.mxu0 %v471
    %1094 = vmatprep.subr.mxu0 %v476
    %1095 = vmatpush1.msra.mxu0 %v475
    %1096 = vmatprep.subr.mxu0 %v480
    %1097 = vmatpush1.msra.mxu0 %v479
    %1098 = vmatprep.subr.mxu0 %v484
    %1099 = vmatpush1.msra.mxu0 %v483
    %1100 = vmatprep.subr.mxu0 %v488
    %1101 = vmatpush1.msra.mxu0 %v487
    %1102 = vmatprep.subr.mxu0 %v492
    %1103 = vmatpush1.msra.mxu0 %v491
    %1104 = vmatprep.subr.mxu0 %v496
    %1105 = vmatpush1.msra.mxu0 %v495
    %1106 = vmatprep.subr.mxu0 %v500
    %1107 = vmatpush1.msra.mxu0 %v499
    %1108 = vmatprep.subr.mxu0 %v504
    %1109 = vmatpush1.msra.mxu0 %v503
    %1110 = vmatprep.subr.mxu0 %v508
    %1111 = vmatpush1.msra.mxu0 %v507
    %1112 = vmatprep.subr.mxu0 %v512
    %1113 = vmatpush1.msra.mxu0 %v511
    %1114 = vmatprep.subr.mxu0 %v516
    %1115 = vmatpush1.msra.mxu0 %v515
    %1116 = vmatprep.subr.mxu0 %v520
    %1117 = vmatpush1.msra.mxu0 %v519
    %1118 = vmatprep.subr.mxu0 0.0
    %1119 = vmatpush1.msra.mxu0 0.0
    %1120 = vmatprep.subr.mxu0 0.0
    %1121 = vmatpush1.msra.mxu0 0.0
    %1122 = vmatprep.subr.mxu0 0.0
    %1123 = vmatpush1.msra.mxu0 0.0
    %1124 = vmatprep.subr.mxu0 0.0
    %1125 = vmatpush1.msra.mxu0 0.0
    %1126 = vmatprep.subr.mxu0 0.0
    %1127 = vmatpush1.msra.mxu0 0.0
    %1128 = vmatprep.subr.mxu0 0.0
    %1129 = vmatpush1.msra.mxu0 0.0
    %1130 = vmatprep.subr.mxu0 0.0
    %1131 = vmatpush1.msra.mxu0 0.0
    %1132 = vmatprep.subr.mxu0 0.0
    %1133 = vmatpush1.msra.mxu0 0.0
    %1134 = vmatprep.subr.mxu0 0.0
    %1135 = vmatpush1.msra.mxu0 0.0
    %1136 = vmatprep.subr.mxu0 0.0
    %1137 = vmatpush1.msra.mxu0 0.0
    %1138 = vmatprep.subr.mxu0 0.0
    %1139 = vmatpush1.msra.mxu0 0.0
    %1140 = vmatprep.subr.mxu0 0.0
    %1141 = vmatpush1.msra.mxu0 0.0
    %1142 = vmatprep.subr.mxu0 0.0
    %1143 = vmatpush1.msra.mxu0 0.0
    %1144 = vmatprep.subr.mxu0 0.0
    %1145 = vmatpush1.msra.mxu0 0.0
    %1146 = vmatprep.subr.mxu0 0.0
    %1147 = vmatpush1.msra.mxu0 0.0
    %1148 = vmatprep.subr.mxu0 0.0
    %1149 = vmatpush1.msra.mxu0 0.0
    %1150 = vmatprep.mubr.f32.mxu0 0.0
    %1151 = vmatmul.mubr.f32.gmra.mrb[0].mxu0 %v1075
    %v1152 = vpop.f32.mrb[0].mxu0
    %v1153 = vadd.f32 0.0, %v1152
    %v1154 = vpop.f32.mrb[0].mxu0
    %v1155 = vadd.f32 0.0, %v1154
    %1156 = vdwg.mxu0
    %1157 = vmatprep.subr.mxu0 %v462
    %1158 = vmatpush1.msra.mxu0 %v461
    %1159 = vmatprep.subr.mxu0 %v466
    %1160 = vmatpush1.msra.mxu0 %v465
    %1161 = vmatprep.subr.mxu0 %v470
    %1162 = vmatpush1.msra.mxu0 %v469
    %1163 = vmatprep.subr.mxu0 %v474
    %1164 = vmatpush1.msra.mxu0 %v473
    %1165 = vmatprep.subr.mxu0 %v478
    %1166 = vmatpush1.msra.mxu0 %v477
    %1167 = vmatprep.subr.mxu0 %v482
    %1168 = vmatpush1.msra.mxu0 %v481
    %1169 = vmatprep.subr.mxu0 %v486
    %1170 = vmatpush1.msra.mxu0 %v485
    %1171 = vmatprep.subr.mxu0 %v490
    %1172 = vmatpush1.msra.mxu0 %v489
    %1173 = vmatprep.subr.mxu0 %v494
    %1174 = vmatpush1.msra.mxu0 %v493
    %1175 = vmatprep.subr.mxu0 %v498
    %1176 = vmatpush1.msra.mxu0 %v497
    %1177 = vmatprep.subr.mxu0 %v502
    %1178 = vmatpush1.msra.mxu0 %v501
    %1179 = vmatprep.subr.mxu0 %v506
    %1180 = vmatpush1.msra.mxu0 %v505
    %1181 = vmatprep.subr.mxu0 %v510
    %1182 = vmatpush1.msra.mxu0 %v509
    %1183 = vmatprep.subr.mxu0 %v514
    %1184 = vmatpush1.msra.mxu0 %v513
    %1185 = vmatprep.subr.mxu0 %v518
    %1186 = vmatpush1.msra.mxu0 %v517
    %1187 = vmatprep.subr.mxu0 %v522
    %1188 = vmatpush1.msra.mxu0 %v521
    %1189 = vmatprep.subr.mxu0 0.0
    %1190 = vmatpush1.msra.mxu0 0.0
    %1191 = vmatprep.subr.mxu0 0.0
    %1192 = vmatpush1.msra.mxu0 0.0
    %1193 = vmatprep.subr.mxu0 0.0
    %1194 = vmatpush1.msra.mxu0 0.0
    %1195 = vmatprep.subr.mxu0 0.0
    %1196 = vmatpush1.msra.mxu0 0.0
    %1197 = vmatprep.subr.mxu0 0.0
    %1198 = vmatpush1.msra.mxu0 0.0
    %1199 = vmatprep.subr.mxu0 0.0
    %1200 = vmatpush1.msra.mxu0 0.0
    %1201 = vmatprep.subr.mxu0 0.0
    %1202 = vmatpush1.msra.mxu0 0.0
    %1203 = vmatprep.subr.mxu0 0.0
    %1204 = vmatpush1.msra.mxu0 0.0
    %1205 = vmatprep.subr.mxu0 0.0
    %1206 = vmatpush1.msra.mxu0 0.0
    %1207 = vmatprep.subr.mxu0 0.0
    %1208 = vmatpush1.msra.mxu0 0.0
    %1209 = vmatprep.subr.mxu0 0.0
    %1210 = vmatpush1.msra.mxu0 0.0
    %1211 = vmatprep.subr.mxu0 0.0
    %1212 = vmatpush1.msra.mxu0 0.0
    %1213 = vmatprep.subr.mxu0 0.0
    %1214 = vmatpush1.msra.mxu0 0.0
    %1215 = vmatprep.subr.mxu0 0.0
    %1216 = vmatpush1.msra.mxu0 0.0
    %1217 = vmatprep.subr.mxu0 0.0
    %1218 = vmatpush1.msra.mxu0 0.0
    %1219 = vmatprep.subr.mxu0 0.0
    %1220 = vmatpush1.msra.mxu0 0.0
    %1221 = vmatprep.mubr.f32.mxu0 0.0
    %1222 = vmatmul.mubr.f32.gmra.mrb[0].mxu0 %v1075
    %v1223 = vpop.f32.mrb[0].mxu0
    %v1224 = vadd.f32 0.0, %v1223
    %v1225 = vpop.f32.mrb[0].mxu0
    %v1226 = vadd.f32 0.0, %v1225
    %1227 = vdwg.mxu0
    %v1228 = vadd.f32 %v1082, %v1153
    %v1229 = vadd.f32 %v1083, %v1155
    %v1230 = vadd.f32 %v1084, %v1224
    %v1231 = vadd.f32 %v1085, %v1226
    %v1232 = vxor.u32 %v1228, 2147483648
    %v1233 = vmul.f32 %v1232, 1.442695
    %v1234 = vpow.pop %v1233
    %v1235 = vadd.f32 %v1234, 1.0
    %v1236 = vrcp.pop %v1235
    %v1237 = vmul.f32 1.0, %v1236
    %v1238 = vxor.u32 %v1229, 2147483648
    %v1239 = vmul.f32 %v1238, 1.442695
    %v1240 = vpow.pop %v1239
    %v1241 = vadd.f32 %v1240, 1.0
    %v1242 = vrcp.pop %v1241
    %v1243 = vmul.f32 1.0, %v1242
    %v1244 = vtanh.pop %v1230
    %v1245 = vxor.u32 %v1231, 2147483648
    %v1246 = vmul.f32 %v1245, 1.442695
    %v1247 = vpow.pop %v1246
    %v1248 = vadd.f32 %v1247, 1.0
    %v1249 = vrcp.pop %v1248
    %v1250 = vmul.f32 1.0, %v1249
    %v1251 = vmul.f32 %v1243, %v1078
    %v1252 = vmul.f32 %v1237, %v1244
    %v1253 = vadd.f32 %v1251, %v1252
    %v1254 = vtanh.pop %v1253
    %v1255 = vmul.f32 %v1250, %v1254
    %s1256 = scalar_lea.vmem [#allocation3], 24
    %v1257 = vld [vmem:[%s1256] sm:$0xff]
    %v1258 = vmul.f32 %v1257, %v1255
    %v1259 = vsub.f32 1.0, %v1257
    %v1260 = vmul.f32 %v1259, %v1075
    %v1261 = vadd.f32 %v1258, %v1260
    %v1262 = vmul.f32 %v1257, %v1253
    %v1263 = vmul.f32 %v1259, %v1078
    %v1264 = vadd.f32 %v1262, %v1263
    %s1265 = smul.u32 4, 4
    %s1266 = smul.addr %s1265, 8
    %s1267 = scalar_lea.vmem [#allocation2], %s1266
    %v1268 = vld [vmem:[%s1267] sm:$0xff]
    %v1269 = vld [vmem:[%s1267 + $0x8] sm:$0xff]
    %v1270 = vld [vmem:[%s1267 + $0x10] sm:$0xff]
    %v1271 = vld [vmem:[%s1267 + $0x18] sm:$0xff]
    %1272 = vmatprep.subr.mxu0 %v460
    %1273 = vmatpush1.msra.mxu0 %v459
    %1274 = vmatprep.subr.mxu0 %v464
    %1275 = vmatpush1.msra.mxu0 %v463
    %1276 = vmatprep.subr.mxu0 %v468
    %1277 = vmatpush1.msra.mxu0 %v467
    %1278 = vmatprep.subr.mxu0 %v472
    %1279 = vmatpush1.msra.mxu0 %v471
    %1280 = vmatprep.subr.mxu0 %v476
    %1281 = vmatpush1.msra.mxu0 %v475
    %1282 = vmatprep.subr.mxu0 %v480
    %1283 = vmatpush1.msra.mxu0 %v479
    %1284 = vmatprep.subr.mxu0 %v484
    %1285 = vmatpush1.msra.mxu0 %v483
    %1286 = vmatprep.subr.mxu0 %v488
    %1287 = vmatpush1.msra.mxu0 %v487
    %1288 = vmatprep.subr.mxu0 %v492
    %1289 = vmatpush1.msra.mxu0 %v491
    %1290 = vmatprep.subr.mxu0 %v496
    %1291 = vmatpush1.msra.mxu0 %v495
    %1292 = vmatprep.subr.mxu0 %v500
    %1293 = vmatpush1.msra.mxu0 %v499
    %1294 = vmatprep.subr.mxu0 %v504
    %1295 = vmatpush1.msra.mxu0 %v503
    %1296 = vmatprep.subr.mxu0 %v508
    %1297 = vmatpush1.msra.mxu0 %v507
    %1298 = vmatprep.subr.mxu0 %v512
    %1299 = vmatpush1.msra.mxu0 %v511
    %1300 = vmatprep.subr.mxu0 %v516
    %1301 = vmatpush1.msra.mxu0 %v515
    %1302 = vmatprep.subr.mxu0 %v520
    %1303 = vmatpush1.msra.mxu0 %v519
    %1304 = vmatprep.subr.mxu0 0.0
    %1305 = vmatpush1.msra.mxu0 0.0
    %1306 = vmatprep.subr.mxu0 0.0
    %1307 = vmatpush1.msra.mxu0 0.0
    %1308 = vmatprep.subr.mxu0 0.0
    %1309 = vmatpush1.msra.mxu0 0.0
    %1310 = vmatprep.subr.mxu0 0.0
    %1311 = vmatpush1.msra.mxu0 0.0
    %1312 = vmatprep.subr.mxu0 0.0
    %1313 = vmatpush1.msra.mxu0 0.0
    %1314 = vmatprep.subr.mxu0 0.0
    %1315 = vmatpush1.msra.mxu0 0.0
    %1316 = vmatprep.subr.mxu0 0.0
    %1317 = vmatpush1.msra.mxu0 0.0
    %1318 = vmatprep.subr.mxu0 0.0
    %1319 = vmatpush1.msra.mxu0 0.0
    %1320 = vmatprep.subr.mxu0 0.0
    %1321 = vmatpush1.msra.mxu0 0.0
    %1322 = vmatprep.subr.mxu0 0.0
    %1323 = vmatpush1.msra.mxu0 0.0
    %1324 = vmatprep.subr.mxu0 0.0
    %1325 = vmatpush1.msra.mxu0 0.0
    %1326 = vmatprep.subr.mxu0 0.0
    %1327 = vmatpush1.msra.mxu0 0.0
    %1328 = vmatprep.subr.mxu0 0.0
    %1329 = vmatpush1.msra.mxu0 0.0
    %1330 = vmatprep.subr.mxu0 0.0
    %1331 = vmatpush1.msra.mxu0 0.0
    %1332 = vmatprep.subr.mxu0 0.0
    %1333 = vmatpush1.msra.mxu0 0.0
    %1334 = vmatprep.subr.mxu0 0.0
    %1335 = vmatpush1.msra.mxu0 0.0
    %1336 = vmatprep.mubr.f32.mxu0 0.0
    %1337 = vmatmul.mubr.f32.gmra.mrb[0].mxu0 %v1261
    %v1338 = vpop.f32.mrb[0].mxu0
    %v1339 = vadd.f32 0.0, %v1338
    %v1340 = vpop.f32.mrb[0].mxu0
    %v1341 = vadd.f32 0.0, %v1340
    %1342 = vdwg.mxu0
    %1343 = vmatprep.subr.mxu0 %v462
    %1344 = vmatpush1.msra.mxu0 %v461
    %1345 = vmatprep.subr.mxu0 %v466
    %1346 = vmatpush1.msra.mxu0 %v465
    %1347 = vmatprep.subr.mxu0 %v470
    %1348 = vmatpush1.msra.mxu0 %v469
    %1349 = vmatprep.subr.mxu0 %v474
    %1350 = vmatpush1.msra.mxu0 %v473
    %1351 = vmatprep.subr.mxu0 %v478
    %1352 = vmatpush1.msra.mxu0 %v477
    %1353 = vmatprep.subr.mxu0 %v482
    %1354 = vmatpush1.msra.mxu0 %v481
    %1355 = vmatprep.subr.mxu0 %v486
    %1356 = vmatpush1.msra.mxu0 %v485
    %1357 = vmatprep.subr.mxu0 %v490
    %1358 = vmatpush1.msra.mxu0 %v489
    %1359 = vmatprep.subr.mxu0 %v494
    %1360 = vmatpush1.msra.mxu0 %v493
    %1361 = vmatprep.subr.mxu0 %v498
    %1362 = vmatpush1.msra.mxu0 %v497
    %1363 = vmatprep.subr.mxu0 %v502
    %1364 = vmatpush1.msra.mxu0 %v501
    %1365 = vmatprep.subr.mxu0 %v506
    %1366 = vmatpush1.msra.mxu0 %v505
    %1367 = vmatprep.subr.mxu0 %v510
    %1368 = vmatpush1.msra.mxu0 %v509
    %1369 = vmatprep.subr.mxu0 %v514
    %1370 = vmatpush1.msra.mxu0 %v513
    %1371 = vmatprep.subr.mxu0 %v518
    %1372 = vmatpush1.msra.mxu0 %v517
    %1373 = vmatprep.subr.mxu0 %v522
    %1374 = vmatpush1.msra.mxu0 %v521
    %1375 = vmatprep.subr.mxu0 0.0
    %1376 = vmatpush1.msra.mxu0 0.0
    %1377 = vmatprep.subr.mxu0 0.0
    %1378 = vmatpush1.msra.mxu0 0.0
    %1379 = vmatprep.subr.mxu0 0.0
    %1380 = vmatpush1.msra.mxu0 0.0
    %1381 = vmatprep.subr.mxu0 0.0
    %1382 = vmatpush1.msra.mxu0 0.0
    %1383 = vmatprep.subr.mxu0 0.0
    %1384 = vmatpush1.msra.mxu0 0.0
    %1385 = vmatprep.subr.mxu0 0.0
    %1386 = vmatpush1.msra.mxu0 0.0
    %1387 = vmatprep.subr.mxu0 0.0
    %1388 = vmatpush1.msra.mxu0 0.0
    %1389 = vmatprep.subr.mxu0 0.0
    %1390 = vmatpush1.msra.mxu0 0.0
    %1391 = vmatprep.subr.mxu0 0.0
    %1392 = vmatpush1.msra.mxu0 0.0
    %1393 = vmatprep.subr.mxu0 0.0
    %1394 = vmatpush1.msra.mxu0 0.0
    %1395 = vmatprep.subr.mxu0 0.0
    %1396 = vmatpush1.msra.mxu0 0.0
    %1397 = vmatprep.subr.mxu0 0.0
    %1398 = vmatpush1.msra.mxu0 0.0
    %1399 = vmatprep.subr.mxu0 0.0
    %1400 = vmatpush1.msra.mxu0 0.0
    %1401 = vmatprep.subr.mxu0 0.0
    %1402 = vmatpush1.msra.mxu0 0.0
    %1403 = vmatprep.subr.mxu0 0.0
    %1404 = vmatpush1.msra.mxu0 0.0
    %1405 = vmatprep.subr.mxu0 0.0
    %1406 = vmatpush1.msra.mxu0 0.0
    %1407 = vmatprep.mubr.f32.mxu0 0.0
    %1408 = vmatmul.mubr.f32.gmra.mrb[0].mxu0 %v1261
    %v1409 = vpop.f32.mrb[0].mxu0
    %v1410 = vadd.f32 0.0, %v1409
    %v1411 = vpop.f32.mrb[0].mxu0
    %v1412 = vadd.f32 0.0, %v1411
    %1413 = vdwg.mxu0
    %v1414 = vadd.f32 %v1268, %v1339
    %v1415 = vadd.f32 %v1269, %v1341
    %v1416 = vadd.f32 %v1270, %v1410
    %v1417 = vadd.f32 %v1271, %v1412
    %v1418 = vxor.u32 %v1414, 2147483648
    %v1419 = vmul.f32 %v1418, 1.442695
    %v1420 = vpow.pop %v1419
    %v1421 = vadd.f32 %v1420, 1.0
    %v1422 = vrcp.pop %v1421
    %v1423 = vmul.f32 1.0, %v1422
    %v1424 = vxor.u32 %v1415, 2147483648
    %v1425 = vmul.f32 %v1424, 1.442695
    %v1426 = vpow.pop %v1425
    %v1427 = vadd.f32 %v1426, 1.0
    %v1428 = vrcp.pop %v1427
    %v1429 = vmul.f32 1.0, %v1428
    %v1430 = vtanh.pop %v1416
    %v1431 = vxor.u32 %v1417, 2147483648
    %v1432 = vmul.f32 %v1431, 1.442695
    %v1433 = vpow.pop %v1432
    %v1434 = vadd.f32 %v1433, 1.0
    %v1435 = vrcp.pop %v1434
    %v1436 = vmul.f32 1.0, %v1435
    %v1437 = vmul.f32 %v1429, %v1264
    %v1438 = vmul.f32 %v1423, %v1430
    %v1439 = vadd.f32 %v1437, %v1438
    %v1440 = vtanh.pop %v1439
    %v1441 = vmul.f32 %v1436, %v1440
    %s1442 = scalar_lea.vmem [#allocation3], 32
    %v1443 = vld [vmem:[%s1442] sm:$0xff]
    %v1444 = vmul.f32 %v1443, %v1441
    %v1445 = vsub.f32 1.0, %v1443
    %v1446 = vmul.f32 %v1445, %v1261
    %v1447 = vadd.f32 %v1444, %v1446
    %v1448 = vmul.f32 %v1443, %v1439
    %v1449 = vmul.f32 %v1445, %v1264
    %v1450 = vadd.f32 %v1448, %v1449
    %s1451 = smul.u32 5, 4
    %s1452 = smul.addr %s1451, 8
    %s1453 = scalar_lea.vmem [#allocation2], %s1452
    %v1454 = vld [vmem:[%s1453] sm:$0xff]
    %v1455 = vld [vmem:[%s1453 + $0x8] sm:$0xff]
    %v1456 = vld [vmem:[%s1453 + $0x10] sm:$0xff]
    %v1457 = vld [vmem:[%s1453 + $0x18] sm:$0xff]
    %1458 = vmatprep.subr.mxu0 %v460
    %1459 = vmatpush1.msra.mxu0 %v459
    %1460 = vmatprep.subr.mxu0 %v464
    %1461 = vmatpush1.msra.mxu0 %v463
    %1462 = vmatprep.subr.mxu0 %v468
    %1463 = vmatpush1.msra.mxu0 %v467
    %1464 = vmatprep.subr.mxu0 %v472
    %1465 = vmatpush1.msra.mxu0 %v471
    %1466 = vmatprep.subr.mxu0 %v476
    %1467 = vmatpush1.msra.mxu0 %v475
    %1468 = vmatprep.subr.mxu0 %v480
    %1469 = vmatpush1.msra.mxu0 %v479
    %1470 = vmatprep.subr.mxu0 %v484
    %1471 = vmatpush1.msra.mxu0 %v483
    %1472 = vmatprep.subr.mxu0 %v488
    %1473 = vmatpush1.msra.mxu0 %v487
    %1474 = vmatprep.subr.mxu0 %v492
    %1475 = vmatpush1.msra.mxu0 %v491
    %1476 = vmatprep.subr.mxu0 %v496
    %1477 = vmatpush1.msra.mxu0 %v495
    %1478 = vmatprep.subr.mxu0 %v500
    %1479 = vmatpush1.msra.mxu0 %v499
    %1480 = vmatprep.subr.mxu0 %v504
    %1481 = vmatpush1.msra.mxu0 %v503
    %1482 = vmatprep.subr.mxu0 %v508
    %1483 = vmatpush1.msra.mxu0 %v507
    %1484 = vmatprep.subr.mxu0 %v512
    %1485 = vmatpush1.msra.mxu0 %v511
    %1486 = vmatprep.subr.mxu0 %v516
    %1487 = vmatpush1.msra.mxu0 %v515
    %1488 = vmatprep.subr.mxu0 %v520
    %1489 = vmatpush1.msra.mxu0 %v519
    %1490 = vmatprep.subr.mxu0 0.0
    %1491 = vmatpush1.msra.mxu0 0.0
    %1492 = vmatprep.subr.mxu0 0.0
    %1493 = vmatpush1.msra.mxu0 0.0
    %1494 = vmatprep.subr.mxu0 0.0
    %1495 = vmatpush1.msra.mxu0 0.0
    %1496 = vmatprep.subr.mxu0 0.0
    %1497 = vmatpush1.msra.mxu0 0.0
    %1498 = vmatprep.subr.mxu0 0.0
    %1499 = vmatpush1.msra.mxu0 0.0
    %1500 = vmatprep.subr.mxu0 0.0
    %1501 = vmatpush1.msra.mxu0 0.0
    %1502 = vmatprep.subr.mxu0 0.0
    %1503 = vmatpush1.msra.mxu0 0.0
    %1504 = vmatprep.subr.mxu0 0.0
    %1505 = vmatpush1.msra.mxu0 0.0
    %1506 = vmatprep.subr.mxu0 0.0
    %1507 = vmatpush1.msra.mxu0 0.0
    %1508 = vmatprep.subr.mxu0 0.0
    %1509 = vmatpush1.msra.mxu0 0.0
    %1510 = vmatprep.subr.mxu0 0.0
    %1511 = vmatpush1.msra.mxu0 0.0
    %1512 = vmatprep.subr.mxu0 0.0
    %1513 = vmatpush1.msra.mxu0 0.0
    %1514 = vmatprep.subr.mxu0 0.0
    %1515 = vmatpush1.msra.mxu0 0.0
    %1516 = vmatprep.subr.mxu0 0.0
    %1517 = vmatpush1.msra.mxu0 0.0
    %1518 = vmatprep.subr.mxu0 0.0
    %1519 = vmatpush1.msra.mxu0 0.0
    %1520 = vmatprep.subr.mxu0 0.0
    %1521 = vmatpush1.msra.mxu0 0.0
    %1522 = vmatprep.mubr.f32.mxu0 0.0
    %1523 = vmatmul.mubr.f32.gmra.mrb[0].mxu0 %v1447
    %v1524 = vpop.f32.mrb[0].mxu0
    %v1525 = vadd.f32 0.0, %v1524
    %v1526 = vpop.f32.mrb[0].mxu0
    %v1527 = vadd.f32 0.0, %v1526
    %1528 = vdwg.mxu0
    %1529 = vmatprep.subr.mxu0 %v462
    %1530 = vmatpush1.msra.mxu0 %v461
    %1531 = vmatprep.subr.mxu0 %v466
    %1532 = vmatpush1.msra.mxu0 %v465
    %1533 = vmatprep.subr.mxu0 %v470
    %1534 = vmatpush1.msra.mxu0 %v469
    %1535 = vmatprep.subr.mxu0 %v474
    %1536 = vmatpush1.msra.mxu0 %v473
    %1537 = vmatprep.subr.mxu0 %v478
    %1538 = vmatpush1.msra.mxu0 %v477
    %1539 = vmatprep.subr.mxu0 %v482
    %1540 = vmatpush1.msra.mxu0 %v481
    %1541 = vmatprep.subr.mxu0 %v486
    %1542 = vmatpush1.msra.mxu0 %v485
    %1543 = vmatprep.subr.mxu0 %v490
    %1544 = vmatpush1.msra.mxu0 %v489
    %1545 = vmatprep.subr.mxu0 %v494
    %1546 = vmatpush1.msra.mxu0 %v493
    %1547 = vmatprep.subr.mxu0 %v498
    %1548 = vmatpush1.msra.mxu0 %v497
    %1549 = vmatprep.subr.mxu0 %v502
    %1550 = vmatpush1.msra.mxu0 %v501
    %1551 = vmatprep.subr.mxu0 %v506
    %1552 = vmatpush1.msra.mxu0 %v505
    %1553 = vmatprep.subr.mxu0 %v510
    %1554 = vmatpush1.msra.mxu0 %v509
    %1555 = vmatprep.subr.mxu0 %v514
    %1556 = vmatpush1.msra.mxu0 %v513
    %1557 = vmatprep.subr.mxu0 %v518
    %1558 = vmatpush1.msra.mxu0 %v517
    %1559 = vmatprep.subr.mxu0 %v522
    %1560 = vmatpush1.msra.mxu0 %v521
    %1561 = vmatprep.subr.mxu0 0.0
    %1562 = vmatpush1.msra.mxu0 0.0
    %1563 = vmatprep.subr.mxu0 0.0
    %1564 = vmatpush1.msra.mxu0 0.0
    %1565 = vmatprep.subr.mxu0 0.0
    %1566 = vmatpush1.msra.mxu0 0.0
    %1567 = vmatprep.subr.mxu0 0.0
    %1568 = vmatpush1.msra.mxu0 0.0
    %1569 = vmatprep.subr.mxu0 0.0
    %1570 = vmatpush1.msra.mxu0 0.0
    %1571 = vmatprep.subr.mxu0 0.0
    %1572 = vmatpush1.msra.mxu0 0.0
    %1573 = vmatprep.subr.mxu0 0.0
    %1574 = vmatpush1.msra.mxu0 0.0
    %1575 = vmatprep.subr.mxu0 0.0
    %1576 = vmatpush1.msra.mxu0 0.0
    %1577 = vmatprep.subr.mxu0 0.0
    %1578 = vmatpush1.msra.mxu0 0.0
    %1579 = vmatprep.subr.mxu0 0.0
    %1580 = vmatpush1.msra.mxu0 0.0
    %1581 = vmatprep.subr.mxu0 0.0
    %1582 = vmatpush1.msra.mxu0 0.0
    %1583 = vmatprep.subr.mxu0 0.0
    %1584 = vmatpush1.msra.mxu0 0.0
    %1585 = vmatprep.subr.mxu0 0.0
    %1586 = vmatpush1.msra.mxu0 0.0
    %1587 = vmatprep.subr.mxu0 0.0
    %1588 = vmatpush1.msra.mxu0 0.0
    %1589 = vmatprep.subr.mxu0 0.0
    %1590 = vmatpush1.msra.mxu0 0.0
    %1591 = vmatprep.subr.mxu0 0.0
    %1592 = vmatpush1.msra.mxu0 0.0
    %1593 = vmatprep.mubr.f32.mxu0 0.0
    %1594 = vmatmul.mubr.f32.gmra.mrb[0].mxu0 %v1447
    %v1595 = vpop.f32.mrb[0].mxu0
    %v1596 = vadd.f32 0.0, %v1595
    %v1597 = vpop.f32.mrb[0].mxu0
    %v1598 = vadd.f32 0.0, %v1597
    %1599 = vdwg.mxu0
    %v1600 = vadd.f32 %v1454, %v1525
    %v1601 = vadd.f32 %v1455, %v1527
    %v1602 = vadd.f32 %v1456, %v1596
    %v1603 = vadd.f32 %v1457, %v1598
    %v1604 = vxor.u32 %v1600, 2147483648
    %v1605 = vmul.f32 %v1604, 1.442695
    %v1606 = vpow.pop %v1605
    %v1607 = vadd.f32 %v1606, 1.0
    %v1608 = vrcp.pop %v1607
    %v1609 = vmul.f32 1.0, %v1608
    %v1610 = vxor.u32 %v1601, 2147483648
    %v1611 = vmul.f32 %v1610, 1.442695
    %v1612 = vpow.pop %v1611
    %v1613 = vadd.f32 %v1612, 1.0
    %v1614 = vrcp.pop %v1613
    %v1615 = vmul.f32 1.0, %v1614
    %v1616 = vtanh.pop %v1602
    %v1617 = vxor.u32 %v1603, 2147483648
    %v1618 = vmul.f32 %v1617, 1.442695
    %v1619 = vpow.pop %v1618
    %v1620 = vadd.f32 %v1619, 1.0
    %v1621 = vrcp.pop %v1620
    %v1622 = vmul.f32 1.0, %v1621
    %v1623 = vmul.f32 %v1615, %v1450
    %v1624 = vmul.f32 %v1609, %v1616
    %v1625 = vadd.f32 %v1623, %v1624
    %v1626 = vtanh.pop %v1625
    %v1627 = vmul.f32 %v1622, %v1626
    %s1628 = scalar_lea.vmem [#allocation3], 40
    %v1629 = vld [vmem:[%s1628] sm:$0xff]
    %v1630 = vmul.f32 %v1629, %v1627
    %v1631 = vsub.f32 1.0, %v1629
    %v1632 = vmul.f32 %v1631, %v1447
    %v1633 = vadd.f32 %v1630, %v1632
    %v1634 = vmul.f32 %v1629, %v1625
    %v1635 = vmul.f32 %v1631, %v1450
    %v1636 = vadd.f32 %v1634, %v1635
    %s1637 = smul.u32 6, 4
    %s1638 = smul.addr %s1637, 8
    %s1639 = scalar_lea.vmem [#allocation2], %s1638
    %v1640 = vld [vmem:[%s1639] sm:$0xff]
    %v1641 = vld [vmem:[%s1639 + $0x8] sm:$0xff]
    %v1642 = vld [vmem:[%s1639 + $0x10] sm:$0xff]
    %v1643 = vld [vmem:[%s1639 + $0x18] sm:$0xff]
    %1644 = vmatprep.subr.mxu0 %v460
    %1645 = vmatpush1.msra.mxu0 %v459
    %1646 = vmatprep.subr.mxu0 %v464
    %1647 = vmatpush1.msra.mxu0 %v463
    %1648 = vmatprep.subr.mxu0 %v468
    %1649 = vmatpush1.msra.mxu0 %v467
    %1650 = vmatprep.subr.mxu0 %v472
    %1651 = vmatpush1.msra.mxu0 %v471
    %1652 = vmatprep.subr.mxu0 %v476
    %1653 = vmatpush1.msra.mxu0 %v475
    %1654 = vmatprep.subr.mxu0 %v480
    %1655 = vmatpush1.msra.mxu0 %v479
    %1656 = vmatprep.subr.mxu0 %v484
    %1657 = vmatpush1.msra.mxu0 %v483
    %1658 = vmatprep.subr.mxu0 %v488
    %1659 = vmatpush1.msra.mxu0 %v487
    %1660 = vmatprep.subr.mxu0 %v492
    %1661 = vmatpush1.msra.mxu0 %v491
    %1662 = vmatprep.subr.mxu0 %v496
    %1663 = vmatpush1.msra.mxu0 %v495
    %1664 = vmatprep.subr.mxu0 %v500
    %1665 = vmatpush1.msra.mxu0 %v499
    %1666 = vmatprep.subr.mxu0 %v504
    %1667 = vmatpush1.msra.mxu0 %v503
    %1668 = vmatprep.subr.mxu0 %v508
    %1669 = vmatpush1.msra.mxu0 %v507
    %1670 = vmatprep.subr.mxu0 %v512
    %1671 = vmatpush1.msra.mxu0 %v511
    %1672 = vmatprep.subr.mxu0 %v516
    %1673 = vmatpush1.msra.mxu0 %v515
    %1674 = vmatprep.subr.mxu0 %v520
    %1675 = vmatpush1.msra.mxu0 %v519
    %1676 = vmatprep.subr.mxu0 0.0
    %1677 = vmatpush1.msra.mxu0 0.0
    %1678 = vmatprep.subr.mxu0 0.0
    %1679 = vmatpush1.msra.mxu0 0.0
    %1680 = vmatprep.subr.mxu0 0.0
    %1681 = vmatpush1.msra.mxu0 0.0
    %1682 = vmatprep.subr.mxu0 0.0
    %1683 = vmatpush1.msra.mxu0 0.0
    %1684 = vmatprep.subr.mxu0 0.0
    %1685 = vmatpush1.msra.mxu0 0.0
    %1686 = vmatprep.subr.mxu0 0.0
    %1687 = vmatpush1.msra.mxu0 0.0
    %1688 = vmatprep.subr.mxu0 0.0
    %1689 = vmatpush1.msra.mxu0 0.0
    %1690 = vmatprep.subr.mxu0 0.0
    %1691 = vmatpush1.msra.mxu0 0.0
    %1692 = vmatprep.subr.mxu0 0.0
    %1693 = vmatpush1.msra.mxu0 0.0
    %1694 = vmatprep.subr.mxu0 0.0
    %1695 = vmatpush1.msra.mxu0 0.0
    %1696 = vmatprep.subr.mxu0 0.0
    %1697 = vmatpush1.msra.mxu0 0.0
    %1698 = vmatprep.subr.mxu0 0.0
    %1699 = vmatpush1.msra.mxu0 0.0
    %1700 = vmatprep.subr.mxu0 0.0
    %1701 = vmatpush1.msra.mxu0 0.0
    %1702 = vmatprep.subr.mxu0 0.0
    %1703 = vmatpush1.msra.mxu0 0.0
    %1704 = vmatprep.subr.mxu0 0.0
    %1705 = vmatpush1.msra.mxu0 0.0
    %1706 = vmatprep.subr.mxu0 0.0
    %1707 = vmatpush1.msra.mxu0 0.0
    %1708 = vmatprep.mubr.f32.mxu0 0.0
    %1709 = vmatmul.mubr.f32.gmra.mrb[0].mxu0 %v1633
    %v1710 = vpop.f32.mrb[0].mxu0
    %v1711 = vadd.f32 0.0, %v1710
    %v1712 = vpop.f32.mrb[0].mxu0
    %v1713 = vadd.f32 0.0, %v1712
    %1714 = vdwg.mxu0
    %1715 = vmatprep.subr.mxu0 %v462
    %1716 = vmatpush1.msra.mxu0 %v461
    %1717 = vmatprep.subr.mxu0 %v466
    %1718 = vmatpush1.msra.mxu0 %v465
    %1719 = vmatprep.subr.mxu0 %v470
    %1720 = vmatpush1.msra.mxu0 %v469
    %1721 = vmatprep.subr.mxu0 %v474
    %1722 = vmatpush1.msra.mxu0 %v473
    %1723 = vmatprep.subr.mxu0 %v478
    %1724 = vmatpush1.msra.mxu0 %v477
    %1725 = vmatprep.subr.mxu0 %v482
    %1726 = vmatpush1.msra.mxu0 %v481
    %1727 = vmatprep.subr.mxu0 %v486
    %1728 = vmatpush1.msra.mxu0 %v485
    %1729 = vmatprep.subr.mxu0 %v490
    %1730 = vmatpush1.msra.mxu0 %v489
    %1731 = vmatprep.subr.mxu0 %v494
    %1732 = vmatpush1.msra.mxu0 %v493
    %1733 = vmatprep.subr.mxu0 %v498
    %1734 = vmatpush1.msra.mxu0 %v497
    %1735 = vmatprep.subr.mxu0 %v502
    %1736 = vmatpush1.msra.mxu0 %v501
    %1737 = vmatprep.subr.mxu0 %v506
    %1738 = vmatpush1.msra.mxu0 %v505
    %1739 = vmatprep.subr.mxu0 %v510
    %1740 = vmatpush1.msra.mxu0 %v509
    %1741 = vmatprep.subr.mxu0 %v514
    %1742 = vmatpush1.msra.mxu0 %v513
    %1743 = vmatprep.subr.mxu0 %v518
    %1744 = vmatpush1.msra.mxu0 %v517
    %1745 = vmatprep.subr.mxu0 %v522
    %1746 = vmatpush1.msra.mxu0 %v521
    %1747 = vmatprep.subr.mxu0 0.0
    %1748 = vmatpush1.msra.mxu0 0.0
    %1749 = vmatprep.subr.mxu0 0.0
    %1750 = vmatpush1.msra.mxu0 0.0
    %1751 = vmatprep.subr.mxu0 0.0
    %1752 = vmatpush1.msra.mxu0 0.0
    %1753 = vmatprep.subr.mxu0 0.0
    %1754 = vmatpush1.msra.mxu0 0.0
    %1755 = vmatprep.subr.mxu0 0.0
    %1756 = vmatpush1.msra.mxu0 0.0
    %1757 = vmatprep.subr.mxu0 0.0
    %1758 = vmatpush1.msra.mxu0 0.0
    %1759 = vmatprep.subr.mxu0 0.0
    %1760 = vmatpush1.msra.mxu0 0.0
    %1761 = vmatprep.subr.mxu0 0.0
    %1762 = vmatpush1.msra.mxu0 0.0
    %1763 = vmatprep.subr.mxu0 0.0
    %1764 = vmatpush1.msra.mxu0 0.0
    %1765 = vmatprep.subr.mxu0 0.0
    %1766 = vmatpush1.msra.mxu0 0.0
    %1767 = vmatprep.subr.mxu0 0.0
    %1768 = vmatpush1.msra.mxu0 0.0
    %1769 = vmatprep.subr.mxu0 0.0
    %1770 = vmatpush1.msra.mxu0 0.0
    %1771 = vmatprep.subr.mxu0 0.0
    %1772 = vmatpush1.msra.mxu0 0.0
    %1773 = vmatprep.subr.mxu0 0.0
    %1774 = vmatpush1.msra.mxu0 0.0
    %1775 = vmatprep.subr.mxu0 0.0
    %1776 = vmatpush1.msra.mxu0 0.0
    %1777 = vmatprep.subr.mxu0 0.0
    %1778 = vmatpush1.msra.mxu0 0.0
    %1779 = vmatprep.mubr.f32.mxu0 0.0
    %1780 = vmatmul.mubr.f32.gmra.mrb[0].mxu0 %v1633
    %v1781 = vpop.f32.mrb[0].mxu0
    %v1782 = vadd.f32 0.0, %v1781
    %v1783 = vpop.f32.mrb[0].mxu0
    %v1784 = vadd.f32 0.0, %v1783
    %1785 = vdwg.mxu0
    %v1786 = vadd.f32 %v1640, %v1711
    %v1787 = vadd.f32 %v1641, %v1713
    %v1788 = vadd.f32 %v1642, %v1782
    %v1789 = vadd.f32 %v1643, %v1784
    %v1790 = vxor.u32 %v1786, 2147483648
    %v1791 = vmul.f32 %v1790, 1.442695
    %v1792 = vpow.pop %v1791
    %v1793 = vadd.f32 %v1792, 1.0
    %v1794 = vrcp.pop %v1793
    %v1795 = vmul.f32 1.0, %v1794
    %v1796 = vxor.u32 %v1787, 2147483648
    %v1797 = vmul.f32 %v1796, 1.442695
    %v1798 = vpow.pop %v1797
    %v1799 = vadd.f32 %v1798, 1.0
    %v1800 = vrcp.pop %v1799
    %v1801 = vmul.f32 1.0, %v1800
    %v1802 = vtanh.pop %v1788
    %v1803 = vxor.u32 %v1789, 2147483648
    %v1804 = vmul.f32 %v1803, 1.442695
    %v1805 = vpow.pop %v1804
    %v1806 = vadd.f32 %v1805, 1.0
    %v1807 = vrcp.pop %v1806
    %v1808 = vmul.f32 1.0, %v1807
    %v1809 = vmul.f32 %v1801, %v1636
    %v1810 = vmul.f32 %v1795, %v1802
    %v1811 = vadd.f32 %v1809, %v1810
    %v1812 = vtanh.pop %v1811
    %v1813 = vmul.f32 %v1808, %v1812
    %s1814 = scalar_lea.vmem [#allocation3], 48
    %v1815 = vld [vmem:[%s1814] sm:$0xff]
    %v1816 = vmul.f32 %v1815, %v1813
    %v1817 = vsub.f32 1.0, %v1815
    %v1818 = vmul.f32 %v1817, %v1633
    %v1819 = vadd.f32 %v1816, %v1818
    %v1820 = vmul.f32 %v1815, %v1811
    %v1821 = vmul.f32 %v1817, %v1636
    %v1822 = vadd.f32 %v1820, %v1821
    %s1823 = smul.u32 7, 4
    %s1824 = smul.addr %s1823, 8
    %s1825 = scalar_lea.vmem [#allocation2], %s1824
    %v1826 = vld [vmem:[%s1825] sm:$0xff]
    %v1827 = vld [vmem:[%s1825 + $0x8] sm:$0xff]
    %v1828 = vld [vmem:[%s1825 + $0x10] sm:$0xff]
    %v1829 = vld [vmem:[%s1825 + $0x18] sm:$0xff]
    %1830 = vmatprep.subr.mxu0 %v460
    %1831 = vmatpush1.msra.mxu0 %v459
    %1832 = vmatprep.subr.mxu0 %v464
    %1833 = vmatpush1.msra.mxu0 %v463
    %1834 = vmatprep.subr.mxu0 %v468
    %1835 = vmatpush1.msra.mxu0 %v467
    %1836 = vmatprep.subr.mxu0 %v472
    %1837 = vmatpush1.msra.mxu0 %v471
    %1838 = vmatprep.subr.mxu0 %v476
    %1839 = vmatpush1.msra.mxu0 %v475
    %1840 = vmatprep.subr.mxu0 %v480
    %1841 = vmatpush1.msra.mxu0 %v479
    %1842 = vmatprep.subr.mxu0 %v484
    %1843 = vmatpush1.msra.mxu0 %v483
    %1844 = vmatprep.subr.mxu0 %v488
    %1845 = vmatpush1.msra.mxu0 %v487
    %1846 = vmatprep.subr.mxu0 %v492
    %1847 = vmatpush1.msra.mxu0 %v491
    %1848 = vmatprep.subr.mxu0 %v496
    %1849 = vmatpush1.msra.mxu0 %v495
    %1850 = vmatprep.subr.mxu0 %v500
    %1851 = vmatpush1.msra.mxu0 %v499
    %1852 = vmatprep.subr.mxu0 %v504
    %1853 = vmatpush1.msra.mxu0 %v503
    %1854 = vmatprep.subr.mxu0 %v508
    %1855 = vmatpush1.msra.mxu0 %v507
    %1856 = vmatprep.subr.mxu0 %v512
    %1857 = vmatpush1.msra.mxu0 %v511
    %1858 = vmatprep.subr.mxu0 %v516
    %1859 = vmatpush1.msra.mxu0 %v515
    %1860 = vmatprep.subr.mxu0 %v520
    %1861 = vmatpush1.msra.mxu0 %v519
    %1862 = vmatprep.subr.mxu0 0.0
    %1863 = vmatpush1.msra.mxu0 0.0
    %1864 = vmatprep.subr.mxu0 0.0
    %1865 = vmatpush1.msra.mxu0 0.0
    %1866 = vmatprep.subr.mxu0 0.0
    %1867 = vmatpush1.msra.mxu0 0.0
    %1868 = vmatprep.subr.mxu0 0.0
    %1869 = vmatpush1.msra.mxu0 0.0
    %1870 = vmatprep.subr.mxu0 0.0
    %1871 = vmatpush1.msra.mxu0 0.0
    %1872 = vmatprep.subr.mxu0 0.0
    %1873 = vmatpush1.msra.mxu0 0.0
    %1874 = vmatprep.subr.mxu0 0.0
    %1875 = vmatpush1.msra.mxu0 0.0
    %1876 = vmatprep.subr.mxu0 0.0
    %1877 = vmatpush1.msra.mxu0 0.0
    %1878 = vmatprep.subr.mxu0 0.0
    %1879 = vmatpush1.msra.mxu0 0.0
    %1880 = vmatprep.subr.mxu0 0.0
    %1881 = vmatpush1.msra.mxu0 0.0
    %1882 = vmatprep.subr.mxu0 0.0
    %1883 = vmatpush1.msra.mxu0 0.0
    %1884 = vmatprep.subr.mxu0 0.0
    %1885 = vmatpush1.msra.mxu0 0.0
    %1886 = vmatprep.subr.mxu0 0.0
    %1887 = vmatpush1.msra.mxu0 0.0
    %1888 = vmatprep.subr.mxu0 0.0
    %1889 = vmatpush1.msra.mxu0 0.0
    %1890 = vmatprep.subr.mxu0 0.0
    %1891 = vmatpush1.msra.mxu0 0.0
    %1892 = vmatprep.subr.mxu0 0.0
    %1893 = vmatpush1.msra.mxu0 0.0
    %1894 = vmatprep.mubr.f32.mxu0 0.0
    %1895 = vmatmul.mubr.f32.gmra.mrb[0].mxu0 %v1819
    %v1896 = vpop.f32.mrb[0].mxu0
    %v1897 = vadd.f32 0.0, %v1896
    %v1898 = vpop.f32.mrb[0].mxu0
    %v1899 = vadd.f32 0.0, %v1898
    %1900 = vdwg.mxu0
    %1901 = vmatprep.subr.mxu0 %v462
    %1902 = vmatpush1.msra.mxu0 %v461
    %1903 = vmatprep.subr.mxu0 %v466
    %1904 = vmatpush1.msra.mxu0 %v465
    %1905 = vmatprep.subr.mxu0 %v470
    %1906 = vmatpush1.msra.mxu0 %v469
    %1907 = vmatprep.subr.mxu0 %v474
    %1908 = vmatpush1.msra.mxu0 %v473
    %1909 = vmatprep.subr.mxu0 %v478
    %1910 = vmatpush1.msra.mxu0 %v477
    %1911 = vmatprep.subr.mxu0 %v482
    %1912 = vmatpush1.msra.mxu0 %v481
    %1913 = vmatprep.subr.mxu0 %v486
    %1914 = vmatpush1.msra.mxu0 %v485
    %1915 = vmatprep.subr.mxu0 %v490
    %1916 = vmatpush1.msra.mxu0 %v489
    %1917 = vmatprep.subr.mxu0 %v494
    %1918 = vmatpush1.msra.mxu0 %v493
    %1919 = vmatprep.subr.mxu0 %v498
    %1920 = vmatpush1.msra.mxu0 %v497
    %1921 = vmatprep.subr.mxu0 %v502
    %1922 = vmatpush1.msra.mxu0 %v501
    %1923 = vmatprep.subr.mxu0 %v506
    %1924 = vmatpush1.msra.mxu0 %v505
    %1925 = vmatprep.subr.mxu0 %v510
    %1926 = vmatpush1.msra.mxu0 %v509
    %1927 = vmatprep.subr.mxu0 %v514
    %1928 = vmatpush1.msra.mxu0 %v513
    %1929 = vmatprep.subr.mxu0 %v518
    %1930 = vmatpush1.msra.mxu0 %v517
    %1931 = vmatprep.subr.mxu0 %v522
    %1932 = vmatpush1.msra.mxu0 %v521
    %1933 = vmatprep.subr.mxu0 0.0
    %1934 = vmatpush1.msra.mxu0 0.0
    %1935 = vmatprep.subr.mxu0 0.0
    %1936 = vmatpush1.msra.mxu0 0.0
    %1937 = vmatprep.subr.mxu0 0.0
    %1938 = vmatpush1.msra.mxu0 0.0
    %1939 = vmatprep.subr.mxu0 0.0
    %1940 = vmatpush1.msra.mxu0 0.0
    %1941 = vmatprep.subr.mxu0 0.0
    %1942 = vmatpush1.msra.mxu0 0.0
    %1943 = vmatprep.subr.mxu0 0.0
    %1944 = vmatpush1.msra.mxu0 0.0
    %1945 = vmatprep.subr.mxu0 0.0
    %1946 = vmatpush1.msra.mxu0 0.0
    %1947 = vmatprep.subr.mxu0 0.0
    %1948 = vmatpush1.msra.mxu0 0.0
    %1949 = vmatprep.subr.mxu0 0.0
    %1950 = vmatpush1.msra.mxu0 0.0
    %1951 = vmatprep.subr.mxu0 0.0
    %1952 = vmatpush1.msra.mxu0 0.0
    %1953 = vmatprep.subr.mxu0 0.0
    %1954 = vmatpush1.msra.mxu0 0.0
    %1955 = vmatprep.subr.mxu0 0.0
    %1956 = vmatpush1.msra.mxu0 0.0
    %1957 = vmatprep.subr.mxu0 0.0
    %1958 = vmatpush1.msra.mxu0 0.0
    %1959 = vmatprep.subr.mxu0 0.0
    %1960 = vmatpush1.msra.mxu0 0.0
    %1961 = vmatprep.subr.mxu0 0.0
    %1962 = vmatpush1.msra.mxu0 0.0
    %1963 = vmatprep.subr.mxu0 0.0
    %1964 = vmatpush1.msra.mxu0 0.0
    %1965 = vmatprep.mubr.f32.mxu0 0.0
    %1966 = vmatmul.mubr.f32.gmra.mrb[0].mxu0 %v1819
    %v1967 = vpop.f32.mrb[0].mxu0
    %v1968 = vadd.f32 0.0, %v1967
    %v1969 = vpop.f32.mrb[0].mxu0
    %v1970 = vadd.f32 0.0, %v1969
    %1971 = vdwg.mxu0
    %v1972 = vadd.f32 %v1826, %v1897
    %v1973 = vadd.f32 %v1827, %v1899
    %v1974 = vadd.f32 %v1828, %v1968
    %v1975 = vadd.f32 %v1829, %v1970
    %v1976 = vxor.u32 %v1972, 2147483648
    %v1977 = vmul.f32 %v1976, 1.442695
    %v1978 = vpow.pop %v1977
    %v1979 = vadd.f32 %v1978, 1.0
    %v1980 = vrcp.pop %v1979
    %v1981 = vmul.f32 1.0, %v1980
    %v1982 = vxor.u32 %v1973, 2147483648
    %v1983 = vmul.f32 %v1982, 1.442695
    %v1984 = vpow.pop %v1983
    %v1985 = vadd.f32 %v1984, 1.0
    %v1986 = vrcp.pop %v1985
    %v1987 = vmul.f32 1.0, %v1986
    %v1988 = vtanh.pop %v1974
    %v1989 = vxor.u32 %v1975, 2147483648
    %v1990 = vmul.f32 %v1989, 1.442695
    %v1991 = vpow.pop %v1990
    %v1992 = vadd.f32 %v1991, 1.0
    %v1993 = vrcp.pop %v1992
    %v1994 = vmul.f32 1.0, %v1993
    %v1995 = vmul.f32 %v1987, %v1822
    %v1996 = vmul.f32 %v1981, %v1988
    %v1997 = vadd.f32 %v1995, %v1996
    %v1998 = vtanh.pop %v1997
    %v1999 = vmul.f32 %v1994, %v1998
    %s2000 = scalar_lea.vmem [#allocation3], 56
    %v2001 = vld [vmem:[%s2000] sm:$0xff]
    %v2002 = vmul.f32 %v2001, %v1999
    %v2003 = vsub.f32 1.0, %v2001
    %v2004 = vmul.f32 %v2003, %v1819
    %v2005 = vadd.f32 %v2002, %v2004
    %v2006 = vld [vmem:[%s4] sm:$0xff]
    %v2007 = vld [vmem:[%s4 + $0x8] sm:$0xff]
    %v2008 = vld [vmem:[%s4 + $0x10] sm:$0xff]
    %v2009 = vld [vmem:[%s4 + $0x18] sm:$0xff]
    %v2010 = vld [vmem:[%s4 + $0x20] sm:$0xff]
    %v2011 = vld [vmem:[%s4 + $0x28] sm:$0xff]
    %v2012 = vld [vmem:[%s4 + $0x30] sm:$0xff]
    %v2013 = vld [vmem:[%s4 + $0x38] sm:$0xff]
    %v2014 = vld [vmem:[%s4 + $0x40] sm:$0xff]
    %v2015 = vld [vmem:[%s4 + $0x48] sm:$0xff]
    %v2016 = vld [vmem:[%s4 + $0x50] sm:$0xff]
    %v2017 = vld [vmem:[%s4 + $0x58] sm:$0xff]
    %v2018 = vld [vmem:[%s4 + $0x60] sm:$0xff]
    %v2019 = vld [vmem:[%s4 + $0x68] sm:$0xff]
    %v2020 = vld [vmem:[%s4 + $0x70] sm:$0xff]
    %v2021 = vld [vmem:[%s4 + $0x78] sm:$0xff]
    %v2022 = vld [vmem:[%s5] sm:$0x1]
    %v2024 = vlaneseq
    %v2025 = vshrl.u32 %v2024, 7
    %v2026 = vsub.s32 0, %v2025
    %v2027 = vrot.slane %v2022, %v2026
    %2029 = vmatprep.subr.mxu0 0.0
    %2030 = vmatpush1.msra.mxu0 %v2006
    %2031 = vmatprep.subr.mxu0 0.0
    %2032 = vmatpush1.msra.mxu0 %v2007
    %2033 = vmatprep.subr.mxu0 0.0
    %2034 = vmatpush1.msra.mxu0 %v2008
    %2035 = vmatprep.subr.mxu0 0.0
    %2036 = vmatpush1.msra.mxu0 %v2009
    %2037 = vmatprep.subr.mxu0 0.0
    %2038 = vmatpush1.msra.mxu0 %v2010
    %2039 = vmatprep.subr.mxu0 0.0
    %2040 = vmatpush1.msra.mxu0 %v2011
    %2041 = vmatprep.subr.mxu0 0.0
    %2042 = vmatpush1.msra.mxu0 %v2012
    %2043 = vmatprep.subr.mxu0 0.0
    %2044 = vmatpush1.msra.mxu0 %v2013
    %2045 = vmatprep.subr.mxu0 0.0
    %2046 = vmatpush1.msra.mxu0 %v2014
    %2047 = vmatprep.subr.mxu0 0.0
    %2048 = vmatpush1.msra.mxu0 %v2015
    %2049 = vmatprep.subr.mxu0 0.0
    %2050 = vmatpush1.msra.mxu0 %v2016
    %2051 = vmatprep.subr.mxu0 0.0
    %2052 = vmatpush1.msra.mxu0 %v2017
    %2053 = vmatprep.subr.mxu0 0.0
    %2054 = vmatpush1.msra.mxu0 %v2018
    %2055 = vmatprep.subr.mxu0 0.0
    %2056 = vmatpush1.msra.mxu0 %v2019
    %2057 = vmatprep.subr.mxu0 0.0
    %2058 = vmatpush1.msra.mxu0 %v2020
    %2059 = vmatprep.subr.mxu0 0.0
    %2060 = vmatpush1.msra.mxu0 %v2021
    %2061 = vmatprep.subr.mxu0 0.0
    %2062 = vmatpush1.msra.mxu0 0.0
    %2063 = vmatprep.subr.mxu0 0.0
    %2064 = vmatpush1.msra.mxu0 0.0
    %2065 = vmatprep.subr.mxu0 0.0
    %2066 = vmatpush1.msra.mxu0 0.0
    %2067 = vmatprep.subr.mxu0 0.0
    %2068 = vmatpush1.msra.mxu0 0.0
    %2069 = vmatprep.subr.mxu0 0.0
    %2070 = vmatpush1.msra.mxu0 0.0
    %2071 = vmatprep.subr.mxu0 0.0
    %2072 = vmatpush1.msra.mxu0 0.0
    %2073 = vmatprep.subr.mxu0 0.0
    %2074 = vmatpush1.msra.mxu0 0.0
    %2075 = vmatprep.subr.mxu0 0.0
    %2076 = vmatpush1.msra.mxu0 0.0
    %2077 = vmatprep.subr.mxu0 0.0
    %2078 = vmatpush1.msra.mxu0 0.0
    %2079 = vmatprep.subr.mxu0 0.0
    %2080 = vmatpush1.msra.mxu0 0.0
    %2081 = vmatprep.subr.mxu0 0.0
    %2082 = vmatpush1.msra.mxu0 0.0
    %2083 = vmatprep.subr.mxu0 0.0
    %2084 = vmatpush1.msra.mxu0 0.0
    %2085 = vmatprep.subr.mxu0 0.0
    %2086 = vmatpush1.msra.mxu0 0.0
    %2087 = vmatprep.subr.mxu0 0.0
    %2088 = vmatpush1.msra.mxu0 0.0
    %2089 = vmatprep.subr.mxu0 0.0
    %2090 = vmatpush1.msra.mxu0 0.0
    %2091 = vmatprep.subr.mxu0 0.0
    %2092 = vmatpush1.msra.mxu0 0.0
    %2093 = vmatprep.mubr.f32.mxu0 0.0
    %2094 = vmatmul.mubr.f32.gmra.mrb[0].mxu0 %v2005
    %v2095 = vpop.f32.mrb[0].mxu0
    %v2096 = vadd.f32 %v2027, %v2095
    %v2097 = vpop.f32.mrb[0].mxu0
    %2098 = vdwg.mxu0
    %v2099 = vtanh.pop %v2096
    %v2100 = vld [vmem:[#allocation6] sm:$0xff]
    %v2101 = vld [vmem:[#allocation6 + $0x8] sm:$0xff]
    %v2102 = vld [vmem:[#allocation6 + $0x10] sm:$0xff]
    %v2103 = vld [vmem:[#allocation6 + $0x18] sm:$0xff]
    %v2104 = vld [vmem:[#allocation6 + $0x20] sm:$0xff]
    %v2105 = vld [vmem:[#allocation6 + $0x28] sm:$0xff]
    %v2106 = vld [vmem:[#allocation6 + $0x30] sm:$0xff]
    %v2107 = vld [vmem:[#allocation6 + $0x38] sm:$0xff]
    %v2108 = vld [vmem:[#allocation6 + $0x40] sm:$0xff]
    %v2109 = vld [vmem:[#allocation6 + $0x48] sm:$0xff]
    %v2110 = vld [vmem:[#allocation6 + $0x50] sm:$0xff]
    %v2111 = vld [vmem:[#allocation6 + $0x58] sm:$0xff]
    %v2112 = vld [vmem:[#allocation6 + $0x60] sm:$0xff]
    %v2113 = vld [vmem:[#allocation6 + $0x68] sm:$0xff]
    %v2114 = vld [vmem:[#allocation6 + $0x70] sm:$0xff]
    %v2115 = vld [vmem:[#allocation6 + $0x78] sm:$0xff]
    %v2116 = vld [vmem:[%s7] sm:$0x1]
    %v2118 = vlaneseq
    %v2119 = vshrl.u32 %v2118, 7
    %v2120 = vsub.s32 0, %v2119
    %v2121 = vrot.slane %v2116, %v2120
    %2123 = vmatprep.subr.mxu0 0.0
    %2124 = vmatpush1.msra.mxu0 %v2100
    %2125 = vmatprep.subr.mxu0 0.0
    %2126 = vmatpush1.msra.mxu0 %v2101
    %2127 = vmatprep.subr.mxu0 0.0
    %2128 = vmatpush1.msra.mxu0 %v2102
    %2129 = vmatprep.subr.mxu0 0.0
    %2130 = vmatpush1.msra.mxu0 %v2103
    %2131 = vmatprep.subr.mxu0 0.0
    %2132 = vmatpush1.msra.mxu0 %v2104
    %2133 = vmatprep.subr.mxu0 0.0
    %2134 = vmatpush1.msra.mxu0 %v2105
    %2135 = vmatprep.subr.mxu0 0.0
    %2136 = vmatpush1.msra.mxu0 %v2106
    %2137 = vmatprep.subr.mxu0 0.0
    %2138 = vmatpush1.msra.mxu0 %v2107
    %2139 = vmatprep.subr.mxu0 0.0
    %2140 = vmatpush1.msra.mxu0 %v2108
    %2141 = vmatprep.subr.mxu0 0.0
    %2142 = vmatpush1.msra.mxu0 %v2109
    %2143 = vmatprep.subr.mxu0 0.0
    %2144 = vmatpush1.msra.mxu0 %v2110
    %2145 = vmatprep.subr.mxu0 0.0
    %2146 = vmatpush1.msra.mxu0 %v2111
    %2147 = vmatprep.subr.mxu0 0.0
    %2148 = vmatpush1.msra.mxu0 %v2112
    %2149 = vmatprep.subr.mxu0 0.0
    %2150 = vmatpush1.msra.mxu0 %v2113
    %2151 = vmatprep.subr.mxu0 0.0
    %2152 = vmatpush1.msra.mxu0 %v2114
    %2153 = vmatprep.subr.mxu0 0.0
    %2154 = vmatpush1.msra.mxu0 %v2115
    %2155 = vmatprep.subr.mxu0 0.0
    %2156 = vmatpush1.msra.mxu0 0.0
    %2157 = vmatprep.subr.mxu0 0.0
    %2158 = vmatpush1.msra.mxu0 0.0
    %2159 = vmatprep.subr.mxu0 0.0
    %2160 = vmatpush1.msra.mxu0 0.0
    %2161 = vmatprep.subr.mxu0 0.0
    %2162 = vmatpush1.msra.mxu0 0.0
    %2163 = vmatprep.subr.mxu0 0.0
    %2164 = vmatpush1.msra.mxu0 0.0
    %2165 = vmatprep.subr.mxu0 0.0
    %2166 = vmatpush1.msra.mxu0 0.0
    %2167 = vmatprep.subr.mxu0 0.0
    %2168 = vmatpush1.msra.mxu0 0.0
    %2169 = vmatprep.subr.mxu0 0.0
    %2170 = vmatpush1.msra.mxu0 0.0
    %2171 = vmatprep.subr.mxu0 0.0
    %2172 = vmatpush1.msra.mxu0 0.0
    %2173 = vmatprep.subr.mxu0 0.0
    %2174 = vmatpush1.msra.mxu0 0.0
    %2175 = vmatprep.subr.mxu0 0.0
    %2176 = vmatpush1.msra.mxu0 0.0
    %2177 = vmatprep.subr.mxu0 0.0
    %2178 = vmatpush1.msra.mxu0 0.0
    %2179 = vmatprep.subr.mxu0 0.0
    %2180 = vmatpush1.msra.mxu0 0.0
    %2181 = vmatprep.subr.mxu0 0.0
    %2182 = vmatpush1.msra.mxu0 0.0
    %2183 = vmatprep.subr.mxu0 0.0
    %2184 = vmatpush1.msra.mxu0 0.0
    %2185 = vmatprep.subr.mxu0 0.0
    %2186 = vmatpush1.msra.mxu0 0.0
    %2187 = vmatprep.mubr.f32.mxu0 0.0
    %2188 = vmatmul.mubr.f32.gmra.mrb[0].mxu0 %v2099
    %v2189 = vpop.f32.mrb[0].mxu0
    %v2190 = vadd.f32 %v2121, %v2189
    %v2191 = vpop.f32.mrb[0].mxu0
    %2192 = vdwg.mxu0
    %v2193 = vlaneseq
    %v2194 = vand.u32 %v2193, 127
    %vm2195 = vcmp.ge.s32.totalorder %v2194, 32
    %v2196 = vmax.f32 %v2190, 0.0
    %v2197 = vand.u32 2147483647, %v2190
    %v2198 = vsub.f32 0.0, %v2197
    %v2199 = vmul.f32 %v2198, 1.442695
    %v2200 = vpow.pop %v2199
    %v2201 = vadd.f32 %v2200, 1.0
    %v2202 = vlog2.pop %v2201
    %v2203 = vmul.f32 %v2202, 0.6931472
    %v2204 = vadd.f32 %v2196, %v2203
    %v2205 = vsel %vm2195, %v2204, %v2190
    %2206 = vst [vmem:[%s8] sm:$0xff] %v2205
    // Predicated region
    $region42: #{encoder_z0_ode_rnn_forward.1} parent=1 // pred_check
      _
    $region43: #{encoder_z0_ode_rnn_forward.1} parent=1 // pred_check_branch
      %2208 = sbr.rel (0) target = $region45
    $region44: #{encoder_z0_ode_rnn_forward.1} parent=1 // pred_region
      _
    $region45: #{encoder_z0_ode_rnn_forward.1} parent=1 // pred_fallthru
      _
    // Predicated region
    $region46: #{encoder_z0_ode_rnn_forward.1} parent=1 // pred_check
      _
    $region47: #{encoder_z0_ode_rnn_forward.1} parent=1 // pred_check_branch
      %2210 = sbr.rel (0) target = $region49
    $region48: #{encoder_z0_ode_rnn_forward.1} parent=1 // pred_region
      _
    $region49: #{encoder_z0_ode_rnn_forward.1} parent=1 // pred_fallthru
      _
    %2211 = vsyncpa [#allocation5], 1
    %2212 = vsyncpa [#allocation7], 1

</llo_original>
